<compile_context>
chip_gen: v5e
topology: v5e:2x2
jax: 0.10.0
libtpu: 0.0.40
codegen_flags: <defaults>
</compile_context>

<pallas_src>
import jax
import jax.numpy as jnp
from jax import lax
from jax.experimental import pallas as pl
from jax.experimental.pallas import tpu as pltpu

NUM_CLASSES = 14
GROWTH = 8            # dense-layer growth rate (channels added per layer)
BOTTLENECK = 8        # 1x1 bottleneck width == input channels of every 3x3 conv
INIT_FEAT = 16        # conv0 output channels
N_LAYERS = 2          # dense layers per block (blocks A and B)
K3_CIN = BOTTLENECK   # every 3x3 conv (incl. the channel-padded conv0) sees 8 inputs


# ---------------------------------------------------------------------------
# Fused forward kernel: one batch tile per grid step; layout = (channels, B*H*W)
# ---------------------------------------------------------------------------

def _make_kernel(W1, W2, BL1, BL2, offsets, n_a, n_b):
    def kernel(x_ref, m1_ref, m2_ref, pool_ref, pbuf_ref, act_ref, log_ref):

        def pget(name):
            off, r, c = offsets[name]
            return pbuf_ref[pl.ds(off, r), pl.ds(0, c)]

        def affine_relu(x, s, b):
            # folded inference-mode BatchNorm + ReLU
            return jnp.maximum(x * s + b, 0.0)

        def conv3x3(x, w, mask, width, L):
            # x: (8, L); w: (Cout, 72) with columns ordered (tap, cin); mask: (72, L).
            # stride 1 / "same" zero padding: 9 pltpu.roll taps stacked on sublanes,
            # out-of-image (and cross-image) taps zeroed by ONE mask multiply, then a
            # single K=72 MXU matmul.
            taps = []
            for dy in (-1, 0, 1):
                for dx in (-1, 0, 1):
                    o = dy * width + dx
                    taps.append(x if o == 0 else pltpu.roll(x, shift=(-o) % L, axis=1))
            stacked = jnp.concatenate(taps, axis=0) * mask          # (72, L)
            return jnp.dot(w, stacked, preferred_element_type=jnp.float32)

        def dense_layer(feat, p, mask, width, L):
            # pre-activation DenseNet layer: BN->ReLU->1x1->BN->ReLU->3x3, concat growth
            h = affine_relu(feat, pget(p + "bn1_s"), pget(p + "bn1_b"))
            mid = jnp.dot(pget(p + "w1"), h, preferred_element_type=jnp.float32)
            mid = affine_relu(mid, pget(p + "bn2_s"), pget(p + "bn2_b"))
            new = conv3x3(mid, pget(p + "w2"), mask, width, L)
            return jnp.concatenate([feat, new], axis=0)   # 8-aligned sublane concat

        x = x_ref[0]                     # (8, B*L1): conv0 input, cin zero-padded to 8
        m1, m2 = m1_ref[...], m2_ref[...]

        # ---- part1: conv0 (3x3) + BN + ReLU + dense block A ----
        feat = conv3x3(x, pget("conv0_w"), m1, W1, BL1)
        feat = affine_relu(feat, pget("bn0_s"), pget("bn0_b"))
        for i in range(n_a):
            feat = dense_layer(feat, f"A{i}_", m1, W1, BL1)

        # Grad-CAM target activations (x.clone()): one aligned, lane-dense store.
        # TODO(synk): register_hook / activations_hook is a backward-pass hook with no
        # forward equivalent; only the saved activations are exposed.
        act_ref[0] = feat

        # ---- part2: transition (BN+ReLU + 1x1 conv + 2x2 avgpool) + dense block B ----
        h = affine_relu(feat, pget("tr_s"), pget("tr_b"))
        t = jnp.dot(pget("tr_w"), h, preferred_element_type=jnp.float32)    # (16, B*L1)
        # 2x2 average pool as a bf16 block-diagonal selection matmul.
        # TODO(synk): replace with a roll-based pool before scaling to real 224x224.
        feat = jnp.dot(t.astype(jnp.bfloat16), pool_ref[...],
                       preferred_element_type=jnp.float32)                  # (16, B*L2)
        for i in range(n_b):
            feat = dense_layer(feat, f"B{i}_", m2, W2, BL2)

        # ---- norm5 + ReLU + adaptive_avg_pool2d((1,1)) + flatten + classifier ----
        h = affine_relu(feat, pget("n5_s"), pget("n5_b"))
        pooled = jnp.dot(h, pget("gap"), preferred_element_type=jnp.float32)    # (32, B)
        logits = jnp.dot(pget("fc_w"), pooled,
                         preferred_element_type=jnp.float32) + pget("fc_b")     # (14, B)
        log_ref[0] = logits

    return kernel


# ---------------------------------------------------------------------------
# Wrapper-side constants (become compile-time constants of the pallas_call)
# ---------------------------------------------------------------------------

def _conv3x3_masks(H, W):
    # mask[t, j] = 1 iff 3x3 tap t applied at flattened position j stays inside the image
    j = jnp.arange(H * W, dtype=jnp.int32)
    y, x = j // W, j % W
    rows = []
    for dy in (-1, 0, 1):
        for dx in (-1, 0, 1):
            ok = (y + dy >= 0) & (y + dy < H) & (x + dx >= 0) & (x + dx < W)
            rows.append(ok.astype(jnp.float32))
    return jnp.stack(rows, axis=0)                      # (9, H*W)


def _avgpool2x2_matrix(H, W, B):
    # block-diagonal (over the folded batch) 2x2 average-pool selection matrix, bf16
    H2, W2 = H // 2, W // 2
    L1, L2 = H * W, H2 * W2
    j = jnp.arange(B * L1, dtype=jnp.int32)
    b, jj = j // L1, j % L1
    y, x = jj // W, jj % W
    dst = b * L2 + (y // 2) * W2 + (x // 2)
    sel = dst[:, None] == jnp.arange(B * L2, dtype=jnp.int32)[None, :]
    return (sel.astype(jnp.float32) * 0.25).astype(jnp.bfloat16)    # (B*L1, B*L2)


def _gap_matrix(B, L2):
    # per-image global-average-pool matrix for the batch-folded lane layout
    lane = jnp.arange(B * L2, dtype=jnp.int32)
    sel = (lane[:, None] // L2) == jnp.arange(B, dtype=jnp.int32)[None, :]
    return sel.astype(jnp.float32) / float(L2)          # (B*L2, B)


def _conv_w_cols(w):
    # torch layout (Cout, Cin, kh, kw) -> (Cout, 9*Cin), columns ordered (tap, cin) to
    # match the in-kernel stacked-tap build.
    cout, cin, kh, kw = w.shape
    return jnp.transpose(w, (0, 2, 3, 1)).reshape(cout, kh * kw * cin)


def _pad_cin(w, cin_to):
    return jnp.pad(w, ((0, 0), (0, cin_to - w.shape[1]), (0, 0), (0, 0)))


def _pack_operands(params, gap):
    """Pack every small parameter tensor (plus the GAP matrix) into one (rows, 128) f32
    buffer; each entry starts at an 8-aligned row and occupies columns [0, cols)."""
    def col(v):
        return jnp.asarray(v, jnp.float32).reshape(-1, 1)

    items = [("conv0_w", _conv_w_cols(_pad_cin(params["conv0_w"], K3_CIN))),
             ("bn0_s", col(params["bn0"][0])), ("bn0_b", col(params["bn0"][1]))]
    for blk, tag in ((params["blockA"], "A"), (params["blockB"], "B")):
        for i, lp in enumerate(blk):
            p = f"{tag}{i}_"
            items += [(p + "bn1_s", col(lp["bn1"][0])), (p + "bn1_b", col(lp["bn1"][1])),
                      (p + "w1", lp["conv1_w"][:, :, 0, 0]),
                      (p + "bn2_s", col(lp["bn2"][0])), (p + "bn2_b", col(lp["bn2"][1])),
                      (p + "w2", _conv_w_cols(lp["conv2_w"]))]
    items += [("tr_s", col(params["trans_bn"][0])), ("tr_b", col(params["trans_bn"][1])),
              ("tr_w", params["trans_conv_w"][:, :, 0, 0]),
              ("n5_s", col(params["norm5"][0])), ("n5_b", col(params["norm5"][1])),
              ("fc_w", params["fc_w"]), ("fc_b", col(params["fc_b"])),
              ("gap", gap)]

    offsets, blocks, off = {}, [], 0
    for name, a in items:
        a = jnp.asarray(a, jnp.float32)
        r, c = a.shape
        rp = -(-r // 8) * 8                               # 8-sublane aligned slices
        blocks.append(jnp.zeros((rp, 128), jnp.float32).at[:r, :c].set(a))
        offsets[name] = (off, r, c)
        off += rp
    return jnp.concatenate(blocks, axis=0), offsets


# ---------------------------------------------------------------------------
# Parameters (deterministic synthetic stand-in for torch.load of the checkpoint)
# ---------------------------------------------------------------------------

def _init_bn(key, c):
    k1, k2, k3, k4 = jax.random.split(key, 4)
    gamma = 1.0 + 0.1 * jax.random.normal(k1, (c,), jnp.float32)
    beta = 0.1 * jax.random.normal(k2, (c,), jnp.float32)
    mean = 0.1 * jax.random.normal(k3, (c,), jnp.float32)
    var = 1.0 + 0.1 * jax.random.uniform(k4, (c,), jnp.float32)
    scale = gamma / jnp.sqrt(var + 1e-5)                 # folded inference-mode BN
    bias = beta - mean * scale
    return scale, bias


def _init_conv(key, cin, cout, k):
    return jax.random.normal(key, (cout, cin, k, k), jnp.float32) / jnp.sqrt(cin * k * k)


def _init_dense_layer(keys, c_in):
    return {"bn1": _init_bn(next(keys), c_in),
            "conv1_w": _init_conv(next(keys), c_in, BOTTLENECK, 1),
            "bn2": _init_bn(next(keys), BOTTLENECK),
            "conv2_w": _init_conv(next(keys), BOTTLENECK, GROWTH, 3)}


def init_params(key):
    keys = iter(jax.random.split(key, 32))
    p = {}
    p["conv0_w"] = _init_conv(next(keys), 3, INIT_FEAT, 3)
    p["bn0"] = _init_bn(next(keys), INIT_FEAT)
    c = INIT_FEAT
    block_a = []
    for _ in range(N_LAYERS):
        block_a.append(_init_dense_layer(keys, c))
        c += GROWTH
    p["blockA"] = block_a                                # c = 32 out of part1
    p["trans_bn"] = _init_bn(next(keys), c)
    p["trans_conv_w"] = _init_conv(next(keys), c, c // 2, 1)
    c //= 2
    block_b = []
    for _ in range(N_LAYERS):
        block_b.append(_init_dense_layer(keys, c))
        c += GROWTH
    p["blockB"] = block_b                                # c = 32 into the classifier
    p["norm5"] = _init_bn(next(keys), c)
    kf, kb = jax.random.split(next(keys))
    p["fc_w"] = jax.random.normal(kf, (NUM_CLASSES, c), jnp.float32) / jnp.sqrt(c)
    p["fc_b"] = 0.01 * jax.random.normal(kb, (NUM_CLASSES,), jnp.float32)
    return p


# ---------------------------------------------------------------------------
# Forward: one fused pallas_call, batch folded onto the lane axis
# ---------------------------------------------------------------------------

def _pick_batch_tile(N, L2):
    # Fold enough images onto the lane axis to fill the 128-lane vregs at half
    # resolution (biggest single lever per the perf review); B must divide N.  When L2
    # already fills a vreg the grid stays per-image, keeping both v7x TCs busy.
    want = max(1, -(-128 // max(L2, 1)))
    best = 1
    for cand in range(1, N + 1):
        if N % cand == 0 and cand <= want:
            best = cand
    return best


def dense_block3_forward(x_nchw, params, batch_tile=None):
    N, cin, H, W = x_nchw.shape
    H2, W2 = H // 2, W // 2
    L1, L2 = H * W, H2 * W2
    B = _pick_batch_tile(N, L2) if batch_tile is None else batch_tile
    assert N % B == 0
    G = N // B
    BL1, BL2 = B * L1, B * L2
    n_a, n_b = len(params["blockA"]), len(params["blockB"])
    c_act = INIT_FEAT + n_a * GROWTH                     # channels produced by part1

    # conv0 input: pad 3 -> 8 channels, fold the batch tile onto the lane axis.
    x = jnp.pad(x_nchw.astype(jnp.float32), ((0, 0), (0, K3_CIN - cin), (0, 0), (0, 0)))
    x = x.reshape(G, B, K3_CIN, L1).transpose(0, 2, 1, 3).reshape(G, K3_CIN, BL1)

    # constants: lane-broadcast stacked tap masks (tiled per image), bf16 pool matrix,
    # and the packed parameter buffer (incl. the per-image GAP matrix).
    m1 = jnp.tile(jnp.repeat(_conv3x3_masks(H, W), K3_CIN, axis=0), (1, B))
    m2 = jnp.tile(jnp.repeat(_conv3x3_masks(H2, W2), K3_CIN, axis=0), (1, B))
    pool = _avgpool2x2_matrix(H, W, B)
    pbuf, offsets = _pack_operands(params, _gap_matrix(B, L2))

    kernel = _make_kernel(W, W2, BL1, BL2, offsets, n_a, n_b)

    def const_spec(a):
        nd = a.ndim
        return pl.BlockSpec(a.shape, lambda n, _nd=nd: (0,) * _nd)

    acts, logits = pl.pallas_call(
        kernel,
        grid=(G,),
        in_specs=[pl.BlockSpec((1, K3_CIN, BL1), lambda n: (n, 0, 0)),
                  const_spec(m1), const_spec(m2), const_spec(pool), const_spec(pbuf)],
        out_specs=(pl.BlockSpec((1, c_act, BL1), lambda n: (n, 0, 0)),
                   pl.BlockSpec((1, NUM_CLASSES, B), lambda n: (n, 0, 0))),
        out_shape=(jax.ShapeDtypeStruct((G, c_act, BL1), jnp.float32),
                   jax.ShapeDtypeStruct((G, NUM_CLASSES, B), jnp.float32)),
        compiler_params=pltpu.CompilerParams(dimension_semantics=("parallel",)),
    )(x, m1, m2, pool, pbuf)

    activations = acts.reshape(G, c_act, B, L1).transpose(0, 2, 1, 3)
    activations = activations.reshape(N, c_act, H, W)    # NCHW, like PyTorch's x.clone()
    logits = logits.transpose(0, 2, 1).reshape(N, NUM_CLASSES)
    return logits, activations


# ---------------------------------------------------------------------------
# Plain-JAX reference (lax.conv based) used to validate the fused kernel
# ---------------------------------------------------------------------------

def _reference_forward(x_nchw, params):
    hi = lax.Precision.HIGHEST

    def conv(x, w, pad):
        return lax.conv_general_dilated(
            x, w, window_strides=(1, 1), padding=((pad, pad), (pad, pad)),
            dimension_numbers=("NCHW", "OIHW", "NCHW"), precision=hi)

    def bnrelu(x, sb):
        s, b = sb
        return jnp.maximum(x * s[None, :, None, None] + b[None, :, None, None], 0.0)

    x = conv(x_nchw.astype(jnp.float32), params["conv0_w"], 1)
    x = bnrelu(x, params["bn0"])
    for lp in params["blockA"]:
        h = bnrelu(x, lp["bn1"])
        h = conv(h, lp["conv1_w"], 0)
        h = bnrelu(h, lp["bn2"])
        h = conv(h, lp["conv2_w"], 1)
        x = jnp.concatenate([x, h], axis=1)
    acts = x

    h = bnrelu(x, params["trans_bn"])
    h = conv(h, params["trans_conv_w"], 0)
    N, C, H, W = h.shape
    hb = h.astype(jnp.bfloat16).astype(jnp.float32)      # mirror the kernel's bf16 pool
    x = hb.reshape(N, C, H // 2, 2, W // 2, 2).mean(axis=(3, 5))
    for lp in params["blockB"]:
        h = bnrelu(x, lp["bn1"])
        h = conv(h, lp["conv1_w"], 0)
        h = bnrelu(h, lp["bn2"])
        h = conv(h, lp["conv2_w"], 1)
        x = jnp.concatenate([x, h], axis=1)

    x = bnrelu(x, params["norm5"])
    pooled = x.mean(axis=(2, 3))                         # adaptive_avg_pool2d((1,1))
    logits = jnp.dot(pooled, params["fc_w"].T, precision=hi) + params["fc_b"][None, :]
    return logits, acts


if __name__ == "__main__":
    key = jax.random.PRNGKey(0)
    k_in, k_par = jax.random.split(key)
    x = jax.random.normal(k_in, (2, 3, 16, 16), jnp.float32)   # NCHW like PyTorch
    params = init_params(k_par)

    logits, acts = jax.jit(dense_block3_forward)(x, params)
    logits, acts = jax.block_until_ready((logits, acts))

    assert logits.shape == (2, NUM_CLASSES), logits.shape
    assert acts.shape == (2, 32, 16, 16), acts.shape
    assert bool(jnp.all(jnp.isfinite(logits))) and bool(jnp.all(jnp.isfinite(acts)))

    # Validate the fused kernel against the plain-JAX reference (tolerance is loose to
    # accommodate MXU-vs-HIGHEST matmul precision differences, tight enough to catch
    # any layout / tap-ordering / packing bug, which would be O(1) off).
    ref_logits, ref_acts = jax.jit(_reference_forward)(x, params)
    assert bool(jnp.allclose(acts, ref_acts, rtol=5e-2, atol=5e-2))
    assert bool(jnp.allclose(logits, ref_logits, rtol=5e-2, atol=5e-2))

    print("KERNEL_OK")
</pallas_src>

<mosaic_0001>
module attributes {stable_mosaic.version = 11 : i64} {
  func.func @kernel(%arg0: i32, %arg1: memref<1x8x512xf32, #tpu.memory_space<vmem>>, %arg2: memref<72x512xf32, #tpu.memory_space<vmem>>, %arg3: memref<72x128xf32, #tpu.memory_space<vmem>>, %arg4: memref<512x128xbf16, #tpu.memory_space<vmem>>, %arg5: memref<640x128xf32, #tpu.memory_space<vmem>>, %arg6: memref<1x32x512xf32, #tpu.memory_space<vmem>>, %arg7: memref<1x14x2xf32, #tpu.memory_space<vmem>>) attributes {dimension_semantics = [#tpu.dimension_semantics<parallel>], iteration_bounds = array<i64: 1>, scalar_prefetch = 0 : i64, scratch_operands = 0 : i64, tpu.core_type = #tpu.core_type<tc>, window_params = [{transform_indices = @transform_0, window_bounds = array<i64: 1, 8, 512>}, {pipeline_mode = #tpu.pipeline_mode<synchronous>, transform_indices = @transform_1, window_bounds = array<i64: 72, 512>}, {pipeline_mode = #tpu.pipeline_mode<synchronous>, transform_indices = @transform_2, window_bounds = array<i64: 72, 128>}, {pipeline_mode = #tpu.pipeline_mode<synchronous>, transform_indices = @transform_3, window_bounds = array<i64: 512, 128>}, {pipeline_mode = #tpu.pipeline_mode<synchronous>, transform_indices = @transform_4, window_bounds = array<i64: 640, 128>}, {transform_indices = @transform_5, window_bounds = array<i64: 1, 32, 512>}, {transform_indices = @transform_6, window_bounds = array<i64: 1, 14, 2>}]} {
    %c0 = arith.constant 0 : index
    %c0_0 = arith.constant 0 : index
    %c0_1 = arith.constant 0 : index
    %0 = vector.load %arg1[%c0, %c0_0, %c0_1] : memref<1x8x512xf32, #tpu.memory_space<vmem>>, vector<1x8x512xf32>
    %1 = vector.shape_cast %0 : vector<1x8x512xf32> to vector<8x512xf32>
    %c0_2 = arith.constant 0 : index
    %c0_3 = arith.constant 0 : index
    %2 = vector.load %arg2[%c0_2, %c0_3] : memref<72x512xf32, #tpu.memory_space<vmem>>, vector<72x512xf32>
    %c0_4 = arith.constant 0 : index
    %c0_5 = arith.constant 0 : index
    %3 = vector.load %arg3[%c0_4, %c0_5] : memref<72x128xf32, #tpu.memory_space<vmem>>, vector<72x128xf32>
    %c0_6 = arith.constant 0 : index
    %c0_7 = arith.constant 0 : index
    %4 = vector.load %arg5[%c0_6, %c0_7] : memref<640x128xf32, #tpu.memory_space<vmem>>, vector<16x72xf32>
    %c17_i32 = arith.constant 17 : i32
    %5 = tpu.dynamic_rotate %1 by %c17_i32 dim 1 : vector<8x512xf32>, i32 -> vector<8x512xf32>
    %c16_i32 = arith.constant 16 : i32
    %6 = tpu.dynamic_rotate %1 by %c16_i32 dim 1 : vector<8x512xf32>, i32 -> vector<8x512xf32>
    %c15_i32 = arith.constant 15 : i32
    %7 = tpu.dynamic_rotate %1 by %c15_i32 dim 1 : vector<8x512xf32>, i32 -> vector<8x512xf32>
    %c1_i32 = arith.constant 1 : i32
    %8 = tpu.dynamic_rotate %1 by %c1_i32 dim 1 : vector<8x512xf32>, i32 -> vector<8x512xf32>
    %c511_i32 = arith.constant 511 : i32
    %9 = tpu.dynamic_rotate %1 by %c511_i32 dim 1 : vector<8x512xf32>, i32 -> vector<8x512xf32>
    %c497_i32 = arith.constant 497 : i32
    %10 = tpu.dynamic_rotate %1 by %c497_i32 dim 1 : vector<8x512xf32>, i32 -> vector<8x512xf32>
    %c496_i32 = arith.constant 496 : i32
    %11 = tpu.dynamic_rotate %1 by %c496_i32 dim 1 : vector<8x512xf32>, i32 -> vector<8x512xf32>
    %c495_i32 = arith.constant 495 : i32
    %12 = tpu.dynamic_rotate %1 by %c495_i32 dim 1 : vector<8x512xf32>, i32 -> vector<8x512xf32>
    %13 = tpu.concatenate %5, %6, %7, %8, %1, %9, %10, %11, %12 in 0 : vector<8x512xf32>, vector<8x512xf32>, vector<8x512xf32>, vector<8x512xf32>, vector<8x512xf32>, vector<8x512xf32>, vector<8x512xf32>, vector<8x512xf32>, vector<8x512xf32> -> vector<72x512xf32>
    %14 = arith.mulf %13, %2 : vector<72x512xf32>
    %cst = arith.constant dense<0.000000e+00> : vector<16x512xf32>
    %15 = tpu.matmul %4, %14, %cst {dimension_numbers = #tpu.dot_dimension_numbers<[1], [0], [0], [1], [0, 0, 1, 1], [], []>} : vector<16x72xf32>, vector<72x512xf32>, vector<16x512xf32> -> vector<16x512xf32>
    %c16 = arith.constant 16 : index
    %c0_8 = arith.constant 0 : index
    %16 = vector.load %arg5[%c16, %c0_8] : memref<640x128xf32, #tpu.memory_space<vmem>>, vector<16x1xf32>
    %c32 = arith.constant 32 : index
    %c0_9 = arith.constant 0 : index
    %17 = vector.load %arg5[%c32, %c0_9] : memref<640x128xf32, #tpu.memory_space<vmem>>, vector<16x1xf32>
    %18 = vector.broadcast %16 : vector<16x1xf32> to vector<16x512xf32>
    %19 = arith.mulf %15, %18 : vector<16x512xf32>
    %20 = vector.broadcast %17 : vector<16x1xf32> to vector<16x512xf32>
    %21 = arith.addf %19, %20 : vector<16x512xf32>
    %cst_10 = arith.constant 0.000000e+00 : f32
    %22 = vector.broadcast %cst_10 : f32 to vector<16x512xf32>
    %23 = arith.maximumf %21, %22 : vector<16x512xf32>
    %c48 = arith.constant 48 : index
    %c0_11 = arith.constant 0 : index
    %24 = vector.load %arg5[%c48, %c0_11] : memref<640x128xf32, #tpu.memory_space<vmem>>, vector<16x1xf32>
    %c64 = arith.constant 64 : index
    %c0_12 = arith.constant 0 : index
    %25 = vector.load %arg5[%c64, %c0_12] : memref<640x128xf32, #tpu.memory_space<vmem>>, vector<16x1xf32>
    %26 = vector.broadcast %24 : vector<16x1xf32> to vector<16x512xf32>
    %27 = arith.mulf %23, %26 : vector<16x512xf32>
    %28 = vector.broadcast %25 : vector<16x1xf32> to vector<16x512xf32>
    %29 = arith.addf %27, %28 : vector<16x512xf32>
    %cst_13 = arith.constant 0.000000e+00 : f32
    %30 = vector.broadcast %cst_13 : f32 to vector<16x512xf32>
    %31 = arith.maximumf %29, %30 : vector<16x512xf32>
    %c80 = arith.constant 80 : index
    %c0_14 = arith.constant 0 : index
    %32 = vector.load %arg5[%c80, %c0_14] : memref<640x128xf32, #tpu.memory_space<vmem>>, vector<8x16xf32>
    %cst_15 = arith.constant dense<0.000000e+00> : vector<8x512xf32>
    %33 = tpu.matmul %32, %31, %cst_15 {dimension_numbers = #tpu.dot_dimension_numbers<[1], [0], [0], [1], [0, 0, 1, 1], [], []>} : vector<8x16xf32>, vector<16x512xf32>, vector<8x512xf32> -> vector<8x512xf32>
    %c88 = arith.constant 88 : index
    %c0_16 = arith.constant 0 : index
    %34 = vector.load %arg5[%c88, %c0_16] : memref<640x128xf32, #tpu.memory_space<vmem>>, vector<8x1xf32>
    %c96 = arith.constant 96 : index
    %c0_17 = arith.constant 0 : index
    %35 = vector.load %arg5[%c96, %c0_17] : memref<640x128xf32, #tpu.memory_space<vmem>>, vector<8x1xf32>
    %36 = vector.broadcast %34 : vector<8x1xf32> to vector<8x512xf32>
    %37 = arith.mulf %33, %36 : vector<8x512xf32>
    %38 = vector.broadcast %35 : vector<8x1xf32> to vector<8x512xf32>
    %39 = arith.addf %37, %38 : vector<8x512xf32>
    %cst_18 = arith.constant 0.000000e+00 : f32
    %40 = vector.broadcast %cst_18 : f32 to vector<8x512xf32>
    %41 = arith.maximumf %39, %40 : vector<8x512xf32>
    %c104 = arith.constant 104 : index
    %c0_19 = arith.constant 0 : index
    %42 = vector.load %arg5[%c104, %c0_19] : memref<640x128xf32, #tpu.memory_space<vmem>>, vector<8x72xf32>
    %c17_i32_20 = arith.constant 17 : i32
    %43 = tpu.dynamic_rotate %41 by %c17_i32_20 dim 1 : vector<8x512xf32>, i32 -> vector<8x512xf32>
    %c16_i32_21 = arith.constant 16 : i32
    %44 = tpu.dynamic_rotate %41 by %c16_i32_21 dim 1 : vector<8x512xf32>, i32 -> vector<8x512xf32>
    %c15_i32_22 = arith.constant 15 : i32
    %45 = tpu.dynamic_rotate %41 by %c15_i32_22 dim 1 : vector<8x512xf32>, i32 -> vector<8x512xf32>
    %c1_i32_23 = arith.constant 1 : i32
    %46 = tpu.dynamic_rotate %41 by %c1_i32_23 dim 1 : vector<8x512xf32>, i32 -> vector<8x512xf32>
    %c511_i32_24 = arith.constant 511 : i32
    %47 = tpu.dynamic_rotate %41 by %c511_i32_24 dim 1 : vector<8x512xf32>, i32 -> vector<8x512xf32>
    %c497_i32_25 = arith.constant 497 : i32
    %48 = tpu.dynamic_rotate %41 by %c497_i32_25 dim 1 : vector<8x512xf32>, i32 -> vector<8x512xf32>
    %c496_i32_26 = arith.constant 496 : i32
    %49 = tpu.dynamic_rotate %41 by %c496_i32_26 dim 1 : vector<8x512xf32>, i32 -> vector<8x512xf32>
    %c495_i32_27 = arith.constant 495 : i32
    %50 = tpu.dynamic_rotate %41 by %c495_i32_27 dim 1 : vector<8x512xf32>, i32 -> vector<8x512xf32>
    %51 = tpu.concatenate %43, %44, %45, %46, %41, %47, %48, %49, %50 in 0 : vector<8x512xf32>, vector<8x512xf32>, vector<8x512xf32>, vector<8x512xf32>, vector<8x512xf32>, vector<8x512xf32>, vector<8x512xf32>, vector<8x512xf32>, vector<8x512xf32> -> vector<72x512xf32>
    %52 = arith.mulf %51, %2 : vector<72x512xf32>
    %cst_28 = arith.constant dense<0.000000e+00> : vector<8x512xf32>
    %53 = tpu.matmul %42, %52, %cst_28 {dimension_numbers = #tpu.dot_dimension_numbers<[1], [0], [0], [1], [0, 0, 1, 1], [], []>} : vector<8x72xf32>, vector<72x512xf32>, vector<8x512xf32> -> vector<8x512xf32>
    %54 = tpu.concatenate %23, %53 in 0 : vector<16x512xf32>, vector<8x512xf32> -> vector<24x512xf32>
    %c112 = arith.constant 112 : index
    %c0_29 = arith.constant 0 : index
    %55 = vector.load %arg5[%c112, %c0_29] : memref<640x128xf32, #tpu.memory_space<vmem>>, vector<24x1xf32>
    %c136 = arith.constant 136 : index
    %c0_30 = arith.constant 0 : index
    %56 = vector.load %arg5[%c136, %c0_30] : memref<640x128xf32, #tpu.memory_space<vmem>>, vector<24x1xf32>
    %57 = vector.broadcast %55 : vector<24x1xf32> to vector<24x512xf32>
    %58 = arith.mulf %54, %57 : vector<24x512xf32>
    %59 = vector.broadcast %56 : vector<24x1xf32> to vector<24x512xf32>
    %60 = arith.addf %58, %59 : vector<24x512xf32>
    %cst_31 = arith.constant 0.000000e+00 : f32
    %61 = vector.broadcast %cst_31 : f32 to vector<24x512xf32>
    %62 = arith.maximumf %60, %61 : vector<24x512xf32>
    %c160 = arith.constant 160 : index
    %c0_32 = arith.constant 0 : index
    %63 = vector.load %arg5[%c160, %c0_32] : memref<640x128xf32, #tpu.memory_space<vmem>>, vector<8x24xf32>
    %cst_33 = arith.constant dense<0.000000e+00> : vector<8x512xf32>
    %64 = tpu.matmul %63, %62, %cst_33 {dimension_numbers = #tpu.dot_dimension_numbers<[1], [0], [0], [1], [0, 0, 1, 1], [], []>} : vector<8x24xf32>, vector<24x512xf32>, vector<8x512xf32> -> vector<8x512xf32>
    %c168 = arith.constant 168 : index
    %c0_34 = arith.constant 0 : index
    %65 = vector.load %arg5[%c168, %c0_34] : memref<640x128xf32, #tpu.memory_space<vmem>>, vector<8x1xf32>
    %c176 = arith.constant 176 : index
    %c0_35 = arith.constant 0 : index
    %66 = vector.load %arg5[%c176, %c0_35] : memref<640x128xf32, #tpu.memory_space<vmem>>, vector<8x1xf32>
    %67 = vector.broadcast %65 : vector<8x1xf32> to vector<8x512xf32>
    %68 = arith.mulf %64, %67 : vector<8x512xf32>
    %69 = vector.broadcast %66 : vector<8x1xf32> to vector<8x512xf32>
    %70 = arith.addf %68, %69 : vector<8x512xf32>
    %cst_36 = arith.constant 0.000000e+00 : f32
    %71 = vector.broadcast %cst_36 : f32 to vector<8x512xf32>
    %72 = arith.maximumf %70, %71 : vector<8x512xf32>
    %c184 = arith.constant 184 : index
    %c0_37 = arith.constant 0 : index
    %73 = vector.load %arg5[%c184, %c0_37] : memref<640x128xf32, #tpu.memory_space<vmem>>, vector<8x72xf32>
    %c17_i32_38 = arith.constant 17 : i32
    %74 = tpu.dynamic_rotate %72 by %c17_i32_38 dim 1 : vector<8x512xf32>, i32 -> vector<8x512xf32>
    %c16_i32_39 = arith.constant 16 : i32
    %75 = tpu.dynamic_rotate %72 by %c16_i32_39 dim 1 : vector<8x512xf32>, i32 -> vector<8x512xf32>
    %c15_i32_40 = arith.constant 15 : i32
    %76 = tpu.dynamic_rotate %72 by %c15_i32_40 dim 1 : vector<8x512xf32>, i32 -> vector<8x512xf32>
    %c1_i32_41 = arith.constant 1 : i32
    %77 = tpu.dynamic_rotate %72 by %c1_i32_41 dim 1 : vector<8x512xf32>, i32 -> vector<8x512xf32>
    %c511_i32_42 = arith.constant 511 : i32
    %78 = tpu.dynamic_rotate %72 by %c511_i32_42 dim 1 : vector<8x512xf32>, i32 -> vector<8x512xf32>
    %c497_i32_43 = arith.constant 497 : i32
    %79 = tpu.dynamic_rotate %72 by %c497_i32_43 dim 1 : vector<8x512xf32>, i32 -> vector<8x512xf32>
    %c496_i32_44 = arith.constant 496 : i32
    %80 = tpu.dynamic_rotate %72 by %c496_i32_44 dim 1 : vector<8x512xf32>, i32 -> vector<8x512xf32>
    %c495_i32_45 = arith.constant 495 : i32
    %81 = tpu.dynamic_rotate %72 by %c495_i32_45 dim 1 : vector<8x512xf32>, i32 -> vector<8x512xf32>
    %82 = tpu.concatenate %74, %75, %76, %77, %72, %78, %79, %80, %81 in 0 : vector<8x512xf32>, vector<8x512xf32>, vector<8x512xf32>, vector<8x512xf32>, vector<8x512xf32>, vector<8x512xf32>, vector<8x512xf32>, vector<8x512xf32>, vector<8x512xf32> -> vector<72x512xf32>
    %83 = arith.mulf %82, %2 : vector<72x512xf32>
    %cst_46 = arith.constant dense<0.000000e+00> : vector<8x512xf32>
    %84 = tpu.matmul %73, %83, %cst_46 {dimension_numbers = #tpu.dot_dimension_numbers<[1], [0], [0], [1], [0, 0, 1, 1], [], []>} : vector<8x72xf32>, vector<72x512xf32>, vector<8x512xf32> -> vector<8x512xf32>
    %85 = tpu.concatenate %54, %84 in 0 : vector<24x512xf32>, vector<8x512xf32> -> vector<32x512xf32>
    %c0_47 = arith.constant 0 : index
    %c0_48 = arith.constant 0 : index
    %c0_49 = arith.constant 0 : index
    %86 = vector.load %arg6[%c0_47, %c0_48, %c0_49] : memref<1x32x512xf32, #tpu.memory_space<vmem>>, vector<1x32x512xf32>
    %87 = vector.shape_cast %86 : vector<1x32x512xf32> to vector<32x512xf32>
    %88 = vector.shape_cast %85 : vector<32x512xf32> to vector<1x32x512xf32>
    tpu.vector_store %arg6[%c0_47, %c0_48, %c0_49], %88 {strides = array<i32>} : memref<1x32x512xf32, #tpu.memory_space<vmem>>, vector<1x32x512xf32>,
    %c336 = arith.constant 336 : index
    %c0_50 = arith.constant 0 : index
    %89 = vector.load %arg5[%c336, %c0_50] : memref<640x128xf32, #tpu.memory_space<vmem>>, vector<32x1xf32>
    %c368 = arith.constant 368 : index
    %c0_51 = arith.constant 0 : index
    %90 = vector.load %arg5[%c368, %c0_51] : memref<640x128xf32, #tpu.memory_space<vmem>>, vector<32x1xf32>
    %91 = vector.broadcast %89 : vector<32x1xf32> to vector<32x512xf32>
    %92 = arith.mulf %85, %91 : vector<32x512xf32>
    %93 = vector.broadcast %90 : vector<32x1xf32> to vector<32x512xf32>
    %94 = arith.addf %92, %93 : vector<32x512xf32>
    %cst_52 = arith.constant 0.000000e+00 : f32
    %95 = vector.broadcast %cst_52 : f32 to vector<32x512xf32>
    %96 = arith.maximumf %94, %95 : vector<32x512xf32>
    %c400 = arith.constant 400 : index
    %c0_53 = arith.constant 0 : index
    %97 = vector.load %arg5[%c400, %c0_53] : memref<640x128xf32, #tpu.memory_space<vmem>>, vector<16x32xf32>
    %cst_54 = arith.constant dense<0.000000e+00> : vector<16x512xf32>
    %98 = tpu.matmul %97, %96, %cst_54 {dimension_numbers = #tpu.dot_dimension_numbers<[1], [0], [0], [1], [0, 0, 1, 1], [], []>} : vector<16x32xf32>, vector<32x512xf32>, vector<16x512xf32> -> vector<16x512xf32>
    %99 = arith.truncf %98 : vector<16x512xf32> to vector<16x512xbf16>
    %c0_55 = arith.constant 0 : index
    %c0_56 = arith.constant 0 : index
    %100 = vector.load %arg4[%c0_55, %c0_56] : memref<512x128xbf16, #tpu.memory_space<vmem>>, vector<512x128xbf16>
    %cst_57 = arith.constant dense<0.000000e+00> : vector<16x128xf32>
    %101 = tpu.matmul %99, %100, %cst_57 {dimension_numbers = #tpu.dot_dimension_numbers<[1], [0], [0], [1], [0, 0, 1, 1], [], []>} : vector<16x512xbf16>, vector<512x128xbf16>, vector<16x128xf32> -> vector<16x128xf32>
    %c192 = arith.constant 192 : index
    %c0_58 = arith.constant 0 : index
    %102 = vector.load %arg5[%c192, %c0_58] : memref<640x128xf32, #tpu.memory_space<vmem>>, vector<16x1xf32>
    %c208 = arith.constant 208 : index
    %c0_59 = arith.constant 0 : index
    %103 = vector.load %arg5[%c208, %c0_59] : memref<640x128xf32, #tpu.memory_space<vmem>>, vector<16x1xf32>
    %104 = vector.broadcast %102 : vector<16x1xf32> to vector<16x128xf32>
    %105 = arith.mulf %101, %104 : vector<16x128xf32>
    %106 = vector.broadcast %103 : vector<16x1xf32> to vector<16x128xf32>
    %107 = arith.addf %105, %106 : vector<16x128xf32>
    %cst_60 = arith.constant 0.000000e+00 : f32
    %108 = vector.broadcast %cst_60 : f32 to vector<16x128xf32>
    %109 = arith.maximumf %107, %108 : vector<16x128xf32>
    %c224 = arith.constant 224 : index
    %c0_61 = arith.constant 0 : index
    %110 = vector.load %arg5[%c224, %c0_61] : memref<640x128xf32, #tpu.memory_space<vmem>>, vector<8x16xf32>
    %cst_62 = arith.constant dense<0.000000e+00> : vector<8x128xf32>
    %111 = tpu.matmul %110, %109, %cst_62 {dimension_numbers = #tpu.dot_dimension_numbers<[1], [0], [0], [1], [0, 0, 1, 1], [], []>} : vector<8x16xf32>, vector<16x128xf32>, vector<8x128xf32> -> vector<8x128xf32>
    %c232 = arith.constant 232 : index
    %c0_63 = arith.constant 0 : index
    %112 = vector.load %arg5[%c232, %c0_63] : memref<640x128xf32, #tpu.memory_space<vmem>>, vector<8x1xf32>
    %c240 = arith.constant 240 : index
    %c0_64 = arith.constant 0 : index
    %113 = vector.load %arg5[%c240, %c0_64] : memref<640x128xf32, #tpu.memory_space<vmem>>, vector<8x1xf32>
    %114 = vector.broadcast %112 : vector<8x1xf32> to vector<8x128xf32>
    %115 = arith.mulf %111, %114 : vector<8x128xf32>
    %116 = vector.broadcast %113 : vector<8x1xf32> to vector<8x128xf32>
    %117 = arith.addf %115, %116 : vector<8x128xf32>
    %cst_65 = arith.constant 0.000000e+00 : f32
    %118 = vector.broadcast %cst_65 : f32 to vector<8x128xf32>
    %119 = arith.maximumf %117, %118 : vector<8x128xf32>
    %c248 = arith.constant 248 : index
    %c0_66 = arith.constant 0 : index
    %120 = vector.load %arg5[%c248, %c0_66] : memref<640x128xf32, #tpu.memory_space<vmem>>, vector<8x72xf32>
    %c9_i32 = arith.constant 9 : i32
    %121 = tpu.dynamic_rotate %119 by %c9_i32 dim 1 : vector<8x128xf32>, i32 -> vector<8x128xf32>
    %c8_i32 = arith.constant 8 : i32
    %122 = tpu.dynamic_rotate %119 by %c8_i32 dim 1 : vector<8x128xf32>, i32 -> vector<8x128xf32>
    %c7_i32 = arith.constant 7 : i32
    %123 = tpu.dynamic_rotate %119 by %c7_i32 dim 1 : vector<8x128xf32>, i32 -> vector<8x128xf32>
    %c1_i32_67 = arith.constant 1 : i32
    %124 = tpu.dynamic_rotate %119 by %c1_i32_67 dim 1 : vector<8x128xf32>, i32 -> vector<8x128xf32>
    %c127_i32 = arith.constant 127 : i32
    %125 = tpu.dynamic_rotate %119 by %c127_i32 dim 1 : vector<8x128xf32>, i32 -> vector<8x128xf32>
    %c121_i32 = arith.constant 121 : i32
    %126 = tpu.dynamic_rotate %119 by %c121_i32 dim 1 : vector<8x128xf32>, i32 -> vector<8x128xf32>
    %c120_i32 = arith.constant 120 : i32
    %127 = tpu.dynamic_rotate %119 by %c120_i32 dim 1 : vector<8x128xf32>, i32 -> vector<8x128xf32>
    %c119_i32 = arith.constant 119 : i32
    %128 = tpu.dynamic_rotate %119 by %c119_i32 dim 1 : vector<8x128xf32>, i32 -> vector<8x128xf32>
    %129 = tpu.concatenate %121, %122, %123, %124, %119, %125, %126, %127, %128 in 0 : vector<8x128xf32>, vector<8x128xf32>, vector<8x128xf32>, vector<8x128xf32>, vector<8x128xf32>, vector<8x128xf32>, vector<8x128xf32>, vector<8x128xf32>, vector<8x128xf32> -> vector<72x128xf32>
    %130 = arith.mulf %129, %3 : vector<72x128xf32>
    %cst_68 = arith.constant dense<0.000000e+00> : vector<8x128xf32>
    %131 = tpu.matmul %120, %130, %cst_68 {dimension_numbers = #tpu.dot_dimension_numbers<[1], [0], [0], [1], [0, 0, 1, 1], [], []>} : vector<8x72xf32>, vector<72x128xf32>, vector<8x128xf32> -> vector<8x128xf32>
    %132 = tpu.concatenate %101, %131 in 0 : vector<16x128xf32>, vector<8x128xf32> -> vector<24x128xf32>
    %c256 = arith.constant 256 : index
    %c0_69 = arith.constant 0 : index
    %133 = vector.load %arg5[%c256, %c0_69] : memref<640x128xf32, #tpu.memory_space<vmem>>, vector<24x1xf32>
    %c280 = arith.constant 280 : index
    %c0_70 = arith.constant 0 : index
    %134 = vector.load %arg5[%c280, %c0_70] : memref<640x128xf32, #tpu.memory_space<vmem>>, vector<24x1xf32>
    %135 = vector.broadcast %133 : vector<24x1xf32> to vector<24x128xf32>
    %136 = arith.mulf %132, %135 : vector<24x128xf32>
    %137 = vector.broadcast %134 : vector<24x1xf32> to vector<24x128xf32>
    %138 = arith.addf %136, %137 : vector<24x128xf32>
    %cst_71 = arith.constant 0.000000e+00 : f32
    %139 = vector.broadcast %cst_71 : f32 to vector<24x128xf32>
    %140 = arith.maximumf %138, %139 : vector<24x128xf32>
    %c304 = arith.constant 304 : index
    %c0_72 = arith.constant 0 : index
    %141 = vector.load %arg5[%c304, %c0_72] : memref<640x128xf32, #tpu.memory_space<vmem>>, vector<8x24xf32>
    %cst_73 = arith.constant dense<0.000000e+00> : vector<8x128xf32>
    %142 = tpu.matmul %141, %140, %cst_73 {dimension_numbers = #tpu.dot_dimension_numbers<[1], [0], [0], [1], [0, 0, 1, 1], [], []>} : vector<8x24xf32>, vector<24x128xf32>, vector<8x128xf32> -> vector<8x128xf32>
    %c312 = arith.constant 312 : index
    %c0_74 = arith.constant 0 : index
    %143 = vector.load %arg5[%c312, %c0_74] : memref<640x128xf32, #tpu.memory_space<vmem>>, vector<8x1xf32>
    %c320 = arith.constant 320 : index
    %c0_75 = arith.constant 0 : index
    %144 = vector.load %arg5[%c320, %c0_75] : memref<640x128xf32, #tpu.memory_space<vmem>>, vector<8x1xf32>
    %145 = vector.broadcast %143 : vector<8x1xf32> to vector<8x128xf32>
    %146 = arith.mulf %142, %145 : vector<8x128xf32>
    %147 = vector.broadcast %144 : vector<8x1xf32> to vector<8x128xf32>
    %148 = arith.addf %146, %147 : vector<8x128xf32>
    %cst_76 = arith.constant 0.000000e+00 : f32
    %149 = vector.broadcast %cst_76 : f32 to vector<8x128xf32>
    %150 = arith.maximumf %148, %149 : vector<8x128xf32>
    %c328 = arith.constant 328 : index
    %c0_77 = arith.constant 0 : index
    %151 = vector.load %arg5[%c328, %c0_77] : memref<640x128xf32, #tpu.memory_space<vmem>>, vector<8x72xf32>
    %c9_i32_78 = arith.constant 9 : i32
    %152 = tpu.dynamic_rotate %150 by %c9_i32_78 dim 1 : vector<8x128xf32>, i32 -> vector<8x128xf32>
    %c8_i32_79 = arith.constant 8 : i32
    %153 = tpu.dynamic_rotate %150 by %c8_i32_79 dim 1 : vector<8x128xf32>, i32 -> vector<8x128xf32>
    %c7_i32_80 = arith.constant 7 : i32
    %154 = tpu.dynamic_rotate %150 by %c7_i32_80 dim 1 : vector<8x128xf32>, i32 -> vector<8x128xf32>
    %c1_i32_81 = arith.constant 1 : i32
    %155 = tpu.dynamic_rotate %150 by %c1_i32_81 dim 1 : vector<8x128xf32>, i32 -> vector<8x128xf32>
    %c127_i32_82 = arith.constant 127 : i32
    %156 = tpu.dynamic_rotate %150 by %c127_i32_82 dim 1 : vector<8x128xf32>, i32 -> vector<8x128xf32>
    %c121_i32_83 = arith.constant 121 : i32
    %157 = tpu.dynamic_rotate %150 by %c121_i32_83 dim 1 : vector<8x128xf32>, i32 -> vector<8x128xf32>
    %c120_i32_84 = arith.constant 120 : i32
    %158 = tpu.dynamic_rotate %150 by %c120_i32_84 dim 1 : vector<8x128xf32>, i32 -> vector<8x128xf32>
    %c119_i32_85 = arith.constant 119 : i32
    %159 = tpu.dynamic_rotate %150 by %c119_i32_85 dim 1 : vector<8x128xf32>, i32 -> vector<8x128xf32>
    %160 = tpu.concatenate %152, %153, %154, %155, %150, %156, %157, %158, %159 in 0 : vector<8x128xf32>, vector<8x128xf32>, vector<8x128xf32>, vector<8x128xf32>, vector<8x128xf32>, vector<8x128xf32>, vector<8x128xf32>, vector<8x128xf32>, vector<8x128xf32> -> vector<72x128xf32>
    %161 = arith.mulf %160, %3 : vector<72x128xf32>
    %cst_86 = arith.constant dense<0.000000e+00> : vector<8x128xf32>
    %162 = tpu.matmul %151, %161, %cst_86 {dimension_numbers = #tpu.dot_dimension_numbers<[1], [0], [0], [1], [0, 0, 1, 1], [], []>} : vector<8x72xf32>, vector<72x128xf32>, vector<8x128xf32> -> vector<8x128xf32>
    %163 = tpu.concatenate %132, %162 in 0 : vector<24x128xf32>, vector<8x128xf32> -> vector<32x128xf32>
    %c416 = arith.constant 416 : index
    %c0_87 = arith.constant 0 : index
    %164 = vector.load %arg5[%c416, %c0_87] : memref<640x128xf32, #tpu.memory_space<vmem>>, vector<32x1xf32>
    %c448 = arith.constant 448 : index
    %c0_88 = arith.constant 0 : index
    %165 = vector.load %arg5[%c448, %c0_88] : memref<640x128xf32, #tpu.memory_space<vmem>>, vector<32x1xf32>
    %166 = vector.broadcast %164 : vector<32x1xf32> to vector<32x128xf32>
    %167 = arith.mulf %163, %166 : vector<32x128xf32>
    %168 = vector.broadcast %165 : vector<32x1xf32> to vector<32x128xf32>
    %169 = arith.addf %167, %168 : vector<32x128xf32>
    %cst_89 = arith.constant 0.000000e+00 : f32
    %170 = vector.broadcast %cst_89 : f32 to vector<32x128xf32>
    %171 = arith.maximumf %169, %170 : vector<32x128xf32>
    %c512 = arith.constant 512 : index
    %c0_90 = arith.constant 0 : index
    %172 = vector.load %arg5[%c512, %c0_90] : memref<640x128xf32, #tpu.memory_space<vmem>>, vector<128x2xf32>
    %cst_91 = arith.constant dense<0.000000e+00> : vector<32x2xf32>
    %173 = tpu.matmul %171, %172, %cst_91 {dimension_numbers = #tpu.dot_dimension_numbers<[1], [0], [0], [1], [0, 0, 1, 1], [], []>} : vector<32x128xf32>, vector<128x2xf32>, vector<32x2xf32> -> vector<32x2xf32>
    %c480 = arith.constant 480 : index
    %c0_92 = arith.constant 0 : index
    %174 = vector.load %arg5[%c480, %c0_92] : memref<640x128xf32, #tpu.memory_space<vmem>>, vector<14x32xf32>
    %cst_93 = arith.constant dense<0.000000e+00> : vector<14x2xf32>
    %175 = tpu.matmul %174, %173, %cst_93 {dimension_numbers = #tpu.dot_dimension_numbers<[1], [0], [0], [1], [0, 0, 1, 1], [], []>} : vector<14x32xf32>, vector<32x2xf32>, vector<14x2xf32> -> vector<14x2xf32>
    %c496 = arith.constant 496 : index
    %c0_94 = arith.constant 0 : index
    %176 = vector.load %arg5[%c496, %c0_94] : memref<640x128xf32, #tpu.memory_space<vmem>>, vector<14x1xf32>
    %177 = vector.broadcast %176 : vector<14x1xf32> to vector<14x2xf32>
    %178 = arith.addf %175, %177 : vector<14x2xf32>
    %c0_95 = arith.constant 0 : index
    %c0_96 = arith.constant 0 : index
    %c0_97 = arith.constant 0 : index
    %179 = vector.load %arg7[%c0_95, %c0_96, %c0_97] : memref<1x14x2xf32, #tpu.memory_space<vmem>>, vector<1x14x2xf32>
    %180 = vector.shape_cast %179 : vector<1x14x2xf32> to vector<14x2xf32>
    %181 = vector.shape_cast %178 : vector<14x2xf32> to vector<1x14x2xf32>
    tpu.vector_store %arg7[%c0_95, %c0_96, %c0_97], %181 {strides = array<i32>} : memref<1x14x2xf32, #tpu.memory_space<vmem>>, vector<1x14x2xf32>,
    return
  }
  func.func @transform_0(%arg0: i32) -> (i32, i32, i32) {
    %c0_i32 = arith.constant 0 : i32
    %c0_i32_0 = arith.constant 0 : i32
    %c0_i32_1 = arith.constant 0 : i32
    return %arg0, %c0_i32, %c0_i32_0 : i32, i32, i32
  }
  func.func @transform_1(%arg0: i32) -> (i32, i32) {
    %c0_i32 = arith.constant 0 : i32
    %c0_i32_0 = arith.constant 0 : i32
    %c0_i32_1 = arith.constant 0 : i32
    return %c0_i32, %c0_i32_0 : i32, i32
  }
  func.func @transform_2(%arg0: i32) -> (i32, i32) {
    %c0_i32 = arith.constant 0 : i32
    %c0_i32_0 = arith.constant 0 : i32
    %c0_i32_1 = arith.constant 0 : i32
    return %c0_i32, %c0_i32_0 : i32, i32
  }
  func.func @transform_3(%arg0: i32) -> (i32, i32) {
    %c0_i32 = arith.constant 0 : i32
    %c0_i32_0 = arith.constant 0 : i32
    %c0_i32_1 = arith.constant 0 : i32
    return %c0_i32, %c0_i32_0 : i32, i32
  }
  func.func @transform_4(%arg0: i32) -> (i32, i32) {
    %c0_i32 = arith.constant 0 : i32
    %c0_i32_0 = arith.constant 0 : i32
    %c0_i32_1 = arith.constant 0 : i32
    return %c0_i32, %c0_i32_0 : i32, i32
  }
  func.func @transform_5(%arg0: i32) -> (i32, i32, i32) {
    %c0_i32 = arith.constant 0 : i32
    %c0_i32_0 = arith.constant 0 : i32
    %c0_i32_1 = arith.constant 0 : i32
    return %arg0, %c0_i32, %c0_i32_0 : i32, i32, i32
  }
  func.func @transform_6(%arg0: i32) -> (i32, i32, i32) {
    %c0_i32 = arith.constant 0 : i32
    %c0_i32_0 = arith.constant 0 : i32
    %c0_i32_1 = arith.constant 0 : i32
    return %arg0, %c0_i32, %c0_i32_0 : i32, i32, i32
  }
}

</mosaic_0001>

<llo_original>
// kernel: tile.15
$region0: #{tile.15}
  %s0 = inlined_call_operand.vmem [shape: f32[72,2,64], index: 0, kind: input, shape index: {}]
  %s1 = inlined_call_operand.vmem [shape: f32[72,128], index: 1, kind: output, shape index: {}]
  $region1: #{tile.15} parent=0
    #allocation0 [shape = 'u8[294912]{0}', space=vmem, size = 0x48000, scoped, tag = 'scoped mem for input reshape']
    %s3 = ssub.s32 4, 1
    %s4 = scalar_lea.vmem %s0, 142
    %v5 = vld [vmem:[%s4] sm:%s3]
    %s6 = scalar_lea.vmem [#allocation0], 568
    %7 = vst [vmem:[%s6] sm:%s3] %v5
    %s8 = scalar_lea.vmem %s0, 140
    %v9 = vld [vmem:[%s8] sm:%s3]
    %s10 = scalar_lea.vmem [#allocation0], 560
    %11 = vst [vmem:[%s10] sm:%s3] %v9
    %s12 = scalar_lea.vmem %s0, 138
    %v13 = vld [vmem:[%s12] sm:%s3]
    %s14 = scalar_lea.vmem [#allocation0], 552
    %15 = vst [vmem:[%s14] sm:%s3] %v13
    %s16 = scalar_lea.vmem %s0, 136
    %v17 = vld [vmem:[%s16] sm:%s3]
    %s18 = scalar_lea.vmem [#allocation0], 544
    %19 = vst [vmem:[%s18] sm:%s3] %v17
    %s20 = scalar_lea.vmem %s0, 134
    %v21 = vld [vmem:[%s20] sm:%s3]
    %s22 = scalar_lea.vmem [#allocation0], 536
    %23 = vst [vmem:[%s22] sm:%s3] %v21
    %s24 = scalar_lea.vmem %s0, 132
    %v25 = vld [vmem:[%s24] sm:%s3]
    %s26 = scalar_lea.vmem [#allocation0], 528
    %27 = vst [vmem:[%s26] sm:%s3] %v25
    %s28 = scalar_lea.vmem %s0, 130
    %v29 = vld [vmem:[%s28] sm:%s3]
    %s30 = scalar_lea.vmem [#allocation0], 520
    %31 = vst [vmem:[%s30] sm:%s3] %v29
    %s32 = scalar_lea.vmem %s0, 128
    %v33 = vld [vmem:[%s32] sm:%s3]
    %s34 = scalar_lea.vmem [#allocation0], 512
    %35 = vst [vmem:[%s34] sm:%s3] %v33
    %s36 = scalar_lea.vmem %s0, 126
    %v37 = vld [vmem:[%s36] sm:%s3]
    %s38 = scalar_lea.vmem [#allocation0], 504
    %39 = vst [vmem:[%s38] sm:%s3] %v37
    %s40 = scalar_lea.vmem %s0, 124
    %v41 = vld [vmem:[%s40] sm:%s3]
    %s42 = scalar_lea.vmem [#allocation0], 496
    %43 = vst [vmem:[%s42] sm:%s3] %v41
    %s44 = scalar_lea.vmem %s0, 122
    %v45 = vld [vmem:[%s44] sm:%s3]
    %s46 = scalar_lea.vmem [#allocation0], 488
    %47 = vst [vmem:[%s46] sm:%s3] %v45
    %s48 = scalar_lea.vmem %s0, 120
    %v49 = vld [vmem:[%s48] sm:%s3]
    %s50 = scalar_lea.vmem [#allocation0], 480
    %51 = vst [vmem:[%s50] sm:%s3] %v49
    %s52 = scalar_lea.vmem %s0, 118
    %v53 = vld [vmem:[%s52] sm:%s3]
    %s54 = scalar_lea.vmem [#allocation0], 472
    %55 = vst [vmem:[%s54] sm:%s3] %v53
    %s56 = scalar_lea.vmem %s0, 116
    %v57 = vld [vmem:[%s56] sm:%s3]
    %s58 = scalar_lea.vmem [#allocation0], 464
    %59 = vst [vmem:[%s58] sm:%s3] %v57
    %s60 = scalar_lea.vmem %s0, 114
    %v61 = vld [vmem:[%s60] sm:%s3]
    %s62 = scalar_lea.vmem [#allocation0], 456
    %63 = vst [vmem:[%s62] sm:%s3] %v61
    %s64 = scalar_lea.vmem %s0, 112
    %v65 = vld [vmem:[%s64] sm:%s3]
    %s66 = scalar_lea.vmem [#allocation0], 448
    %67 = vst [vmem:[%s66] sm:%s3] %v65
    %s68 = scalar_lea.vmem %s0, 110
    %v69 = vld [vmem:[%s68] sm:%s3]
    %s70 = scalar_lea.vmem [#allocation0], 440
    %71 = vst [vmem:[%s70] sm:%s3] %v69
    %s72 = scalar_lea.vmem %s0, 108
    %v73 = vld [vmem:[%s72] sm:%s3]
    %s74 = scalar_lea.vmem [#allocation0], 432
    %75 = vst [vmem:[%s74] sm:%s3] %v73
    %s76 = scalar_lea.vmem %s0, 106
    %v77 = vld [vmem:[%s76] sm:%s3]
    %s78 = scalar_lea.vmem [#allocation0], 424
    %79 = vst [vmem:[%s78] sm:%s3] %v77
    %s80 = scalar_lea.vmem %s0, 104
    %v81 = vld [vmem:[%s80] sm:%s3]
    %s82 = scalar_lea.vmem [#allocation0], 416
    %83 = vst [vmem:[%s82] sm:%s3] %v81
    %s84 = scalar_lea.vmem %s0, 102
    %v85 = vld [vmem:[%s84] sm:%s3]
    %s86 = scalar_lea.vmem [#allocation0], 408
    %87 = vst [vmem:[%s86] sm:%s3] %v85
    %s88 = scalar_lea.vmem %s0, 100
    %v89 = vld [vmem:[%s88] sm:%s3]
    %s90 = scalar_lea.vmem [#allocation0], 400
    %91 = vst [vmem:[%s90] sm:%s3] %v89
    %s92 = scalar_lea.vmem %s0, 98
    %v93 = vld [vmem:[%s92] sm:%s3]
    %s94 = scalar_lea.vmem [#allocation0], 392
    %95 = vst [vmem:[%s94] sm:%s3] %v93
    %s96 = scalar_lea.vmem %s0, 96
    %v97 = vld [vmem:[%s96] sm:%s3]
    %s98 = scalar_lea.vmem [#allocation0], 384
    %99 = vst [vmem:[%s98] sm:%s3] %v97
    %s100 = scalar_lea.vmem %s0, 94
    %v101 = vld [vmem:[%s100] sm:%s3]
    %s102 = scalar_lea.vmem [#allocation0], 376
    %103 = vst [vmem:[%s102] sm:%s3] %v101
    %s104 = scalar_lea.vmem %s0, 92
    %v105 = vld [vmem:[%s104] sm:%s3]
    %s106 = scalar_lea.vmem [#allocation0], 368
    %107 = vst [vmem:[%s106] sm:%s3] %v105
    %s108 = scalar_lea.vmem %s0, 90
    %v109 = vld [vmem:[%s108] sm:%s3]
    %s110 = scalar_lea.vmem [#allocation0], 360
    %111 = vst [vmem:[%s110] sm:%s3] %v109
    %s112 = scalar_lea.vmem %s0, 88
    %v113 = vld [vmem:[%s112] sm:%s3]
    %s114 = scalar_lea.vmem [#allocation0], 352
    %115 = vst [vmem:[%s114] sm:%s3] %v113
    %s116 = scalar_lea.vmem %s0, 86
    %v117 = vld [vmem:[%s116] sm:%s3]
    %s118 = scalar_lea.vmem [#allocation0], 344
    %119 = vst [vmem:[%s118] sm:%s3] %v117
    %s120 = scalar_lea.vmem %s0, 84
    %v121 = vld [vmem:[%s120] sm:%s3]
    %s122 = scalar_lea.vmem [#allocation0], 336
    %123 = vst [vmem:[%s122] sm:%s3] %v121
    %s124 = scalar_lea.vmem %s0, 82
    %v125 = vld [vmem:[%s124] sm:%s3]
    %s126 = scalar_lea.vmem [#allocation0], 328
    %127 = vst [vmem:[%s126] sm:%s3] %v125
    %s128 = scalar_lea.vmem %s0, 80
    %v129 = vld [vmem:[%s128] sm:%s3]
    %s130 = scalar_lea.vmem [#allocation0], 320
    %131 = vst [vmem:[%s130] sm:%s3] %v129
    %s132 = scalar_lea.vmem %s0, 78
    %v133 = vld [vmem:[%s132] sm:%s3]
    %s134 = scalar_lea.vmem [#allocation0], 312
    %135 = vst [vmem:[%s134] sm:%s3] %v133
    %s136 = scalar_lea.vmem %s0, 76
    %v137 = vld [vmem:[%s136] sm:%s3]
    %s138 = scalar_lea.vmem [#allocation0], 304
    %139 = vst [vmem:[%s138] sm:%s3] %v137
    %s140 = scalar_lea.vmem %s0, 74
    %v141 = vld [vmem:[%s140] sm:%s3]
    %s142 = scalar_lea.vmem [#allocation0], 296
    %143 = vst [vmem:[%s142] sm:%s3] %v141
    %s144 = scalar_lea.vmem %s0, 72
    %v145 = vld [vmem:[%s144] sm:%s3]
    %s146 = scalar_lea.vmem [#allocation0], 288
    %147 = vst [vmem:[%s146] sm:%s3] %v145
    %s148 = scalar_lea.vmem %s0, 70
    %v149 = vld [vmem:[%s148] sm:%s3]
    %s150 = scalar_lea.vmem [#allocation0], 280
    %151 = vst [vmem:[%s150] sm:%s3] %v149
    %s152 = scalar_lea.vmem %s0, 68
    %v153 = vld [vmem:[%s152] sm:%s3]
    %s154 = scalar_lea.vmem [#allocation0], 272
    %155 = vst [vmem:[%s154] sm:%s3] %v153
    %s156 = scalar_lea.vmem %s0, 66
    %v157 = vld [vmem:[%s156] sm:%s3]
    %s158 = scalar_lea.vmem [#allocation0], 264
    %159 = vst [vmem:[%s158] sm:%s3] %v157
    %s160 = scalar_lea.vmem %s0, 64
    %v161 = vld [vmem:[%s160] sm:%s3]
    %s162 = scalar_lea.vmem [#allocation0], 256
    %163 = vst [vmem:[%s162] sm:%s3] %v161
    %s164 = scalar_lea.vmem %s0, 62
    %v165 = vld [vmem:[%s164] sm:%s3]
    %s166 = scalar_lea.vmem [#allocation0], 248
    %167 = vst [vmem:[%s166] sm:%s3] %v165
    %s168 = scalar_lea.vmem %s0, 60
    %v169 = vld [vmem:[%s168] sm:%s3]
    %s170 = scalar_lea.vmem [#allocation0], 240
    %171 = vst [vmem:[%s170] sm:%s3] %v169
    %s172 = scalar_lea.vmem %s0, 58
    %v173 = vld [vmem:[%s172] sm:%s3]
    %s174 = scalar_lea.vmem [#allocation0], 232
    %175 = vst [vmem:[%s174] sm:%s3] %v173
    %s176 = scalar_lea.vmem %s0, 56
    %v177 = vld [vmem:[%s176] sm:%s3]
    %s178 = scalar_lea.vmem [#allocation0], 224
    %179 = vst [vmem:[%s178] sm:%s3] %v177
    %s180 = scalar_lea.vmem %s0, 54
    %v181 = vld [vmem:[%s180] sm:%s3]
    %s182 = scalar_lea.vmem [#allocation0], 216
    %183 = vst [vmem:[%s182] sm:%s3] %v181
    %s184 = scalar_lea.vmem %s0, 52
    %v185 = vld [vmem:[%s184] sm:%s3]
    %s186 = scalar_lea.vmem [#allocation0], 208
    %187 = vst [vmem:[%s186] sm:%s3] %v185
    %s188 = scalar_lea.vmem %s0, 50
    %v189 = vld [vmem:[%s188] sm:%s3]
    %s190 = scalar_lea.vmem [#allocation0], 200
    %191 = vst [vmem:[%s190] sm:%s3] %v189
    %s192 = scalar_lea.vmem %s0, 48
    %v193 = vld [vmem:[%s192] sm:%s3]
    %s194 = scalar_lea.vmem [#allocation0], 192
    %195 = vst [vmem:[%s194] sm:%s3] %v193
    %s196 = scalar_lea.vmem %s0, 46
    %v197 = vld [vmem:[%s196] sm:%s3]
    %s198 = scalar_lea.vmem [#allocation0], 184
    %199 = vst [vmem:[%s198] sm:%s3] %v197
    %s200 = scalar_lea.vmem %s0, 44
    %v201 = vld [vmem:[%s200] sm:%s3]
    %s202 = scalar_lea.vmem [#allocation0], 176
    %203 = vst [vmem:[%s202] sm:%s3] %v201
    %s204 = scalar_lea.vmem %s0, 42
    %v205 = vld [vmem:[%s204] sm:%s3]
    %s206 = scalar_lea.vmem [#allocation0], 168
    %207 = vst [vmem:[%s206] sm:%s3] %v205
    %s208 = scalar_lea.vmem %s0, 40
    %v209 = vld [vmem:[%s208] sm:%s3]
    %s210 = scalar_lea.vmem [#allocation0], 160
    %211 = vst [vmem:[%s210] sm:%s3] %v209
    %s212 = scalar_lea.vmem %s0, 38
    %v213 = vld [vmem:[%s212] sm:%s3]
    %s214 = scalar_lea.vmem [#allocation0], 152
    %215 = vst [vmem:[%s214] sm:%s3] %v213
    %s216 = scalar_lea.vmem %s0, 36
    %v217 = vld [vmem:[%s216] sm:%s3]
    %s218 = scalar_lea.vmem [#allocation0], 144
    %219 = vst [vmem:[%s218] sm:%s3] %v217
    %s220 = scalar_lea.vmem %s0, 34
    %v221 = vld [vmem:[%s220] sm:%s3]
    %s222 = scalar_lea.vmem [#allocation0], 136
    %223 = vst [vmem:[%s222] sm:%s3] %v221
    %s224 = scalar_lea.vmem %s0, 32
    %v225 = vld [vmem:[%s224] sm:%s3]
    %s226 = scalar_lea.vmem [#allocation0], 128
    %227 = vst [vmem:[%s226] sm:%s3] %v225
    %s228 = scalar_lea.vmem %s0, 30
    %v229 = vld [vmem:[%s228] sm:%s3]
    %s230 = scalar_lea.vmem [#allocation0], 120
    %231 = vst [vmem:[%s230] sm:%s3] %v229
    %s232 = scalar_lea.vmem %s0, 28
    %v233 = vld [vmem:[%s232] sm:%s3]
    %s234 = scalar_lea.vmem [#allocation0], 112
    %235 = vst [vmem:[%s234] sm:%s3] %v233
    %s236 = scalar_lea.vmem %s0, 26
    %v237 = vld [vmem:[%s236] sm:%s3]
    %s238 = scalar_lea.vmem [#allocation0], 104
    %239 = vst [vmem:[%s238] sm:%s3] %v237
    %s240 = scalar_lea.vmem %s0, 24
    %v241 = vld [vmem:[%s240] sm:%s3]
    %s242 = scalar_lea.vmem [#allocation0], 96
    %243 = vst [vmem:[%s242] sm:%s3] %v241
    %s244 = scalar_lea.vmem %s0, 22
    %v245 = vld [vmem:[%s244] sm:%s3]
    %s246 = scalar_lea.vmem [#allocation0], 88
    %247 = vst [vmem:[%s246] sm:%s3] %v245
    %s248 = scalar_lea.vmem %s0, 20
    %v249 = vld [vmem:[%s248] sm:%s3]
    %s250 = scalar_lea.vmem [#allocation0], 80
    %251 = vst [vmem:[%s250] sm:%s3] %v249
    %s252 = scalar_lea.vmem %s0, 18
    %v253 = vld [vmem:[%s252] sm:%s3]
    %s254 = scalar_lea.vmem [#allocation0], 72
    %255 = vst [vmem:[%s254] sm:%s3] %v253
    %s256 = scalar_lea.vmem %s0, 16
    %v257 = vld [vmem:[%s256] sm:%s3]
    %s258 = scalar_lea.vmem [#allocation0], 64
    %259 = vst [vmem:[%s258] sm:%s3] %v257
    %s260 = scalar_lea.vmem %s0, 14
    %v261 = vld [vmem:[%s260] sm:%s3]
    %s262 = scalar_lea.vmem [#allocation0], 56
    %263 = vst [vmem:[%s262] sm:%s3] %v261
    %s264 = scalar_lea.vmem %s0, 12
    %v265 = vld [vmem:[%s264] sm:%s3]
    %s266 = scalar_lea.vmem [#allocation0], 48
    %267 = vst [vmem:[%s266] sm:%s3] %v265
    %s268 = scalar_lea.vmem %s0, 10
    %v269 = vld [vmem:[%s268] sm:%s3]
    %s270 = scalar_lea.vmem [#allocation0], 40
    %271 = vst [vmem:[%s270] sm:%s3] %v269
    %s272 = scalar_lea.vmem %s0, 8
    %v273 = vld [vmem:[%s272] sm:%s3]
    %s274 = scalar_lea.vmem [#allocation0], 32
    %275 = vst [vmem:[%s274] sm:%s3] %v273
    %s276 = scalar_lea.vmem %s0, 6
    %v277 = vld [vmem:[%s276] sm:%s3]
    %s278 = scalar_lea.vmem [#allocation0], 24
    %279 = vst [vmem:[%s278] sm:%s3] %v277
    %s280 = scalar_lea.vmem %s0, 4
    %v281 = vld [vmem:[%s280] sm:%s3]
    %s282 = scalar_lea.vmem [#allocation0], 16
    %283 = vst [vmem:[%s282] sm:%s3] %v281
    %s284 = scalar_lea.vmem %s0, 2
    %v285 = vld [vmem:[%s284] sm:%s3]
    %s286 = scalar_lea.vmem [#allocation0], 8
    %287 = vst [vmem:[%s286] sm:%s3] %v285
    %v288 = vld [vmem:[%s0] sm:%s3]
    %289 = vst [vmem:[#allocation0] sm:%s3] %v288
    %v290 = vld [vmem:[#allocation0] ss:$8 sm:$0xf]
    %v291 = vld [vmem:[#allocation0] ss:$8 sm:$0xf0]
    %vm292 = vcmask 1047556
    %v293 = vsel %vm292, %v291, %v290
    %vm294 = vcmask 523264
    %295 = vst.msk [vmem:[%s1] sm:$0xff] %vm294, %v293
    %s296 = scalar_lea.vmem [#allocation0], 64
    %v297 = vld [vmem:[%s296] ss:$8 sm:$0xf]
    %s298 = scalar_lea.vmem [#allocation0], 64
    %v299 = vld [vmem:[%s298] ss:$8 sm:$0xf0]
    %vm300 = vcmask 1047556
    %v301 = vsel %vm300, %v299, %v297
    %vm302 = vcmask 523264
    %s303 = scalar_lea.vmem %s1, 8
    %304 = vst.msk [vmem:[%s303] sm:$0xff] %vm302, %v301
    %s305 = scalar_lea.vmem [#allocation0], 128
    %v306 = vld [vmem:[%s305] ss:$8 sm:$0xf]
    %s307 = scalar_lea.vmem [#allocation0], 128
    %v308 = vld [vmem:[%s307] ss:$8 sm:$0xf0]
    %vm309 = vcmask 1047556
    %v310 = vsel %vm309, %v308, %v306
    %vm311 = vcmask 523264
    %s312 = scalar_lea.vmem %s1, 16
    %313 = vst.msk [vmem:[%s312] sm:$0xff] %vm311, %v310
    %s314 = scalar_lea.vmem [#allocation0], 192
    %v315 = vld [vmem:[%s314] ss:$8 sm:$0xf]
    %s316 = scalar_lea.vmem [#allocation0], 192
    %v317 = vld [vmem:[%s316] ss:$8 sm:$0xf0]
    %vm318 = vcmask 1047556
    %v319 = vsel %vm318, %v317, %v315
    %vm320 = vcmask 523264
    %s321 = scalar_lea.vmem %s1, 24
    %322 = vst.msk [vmem:[%s321] sm:$0xff] %vm320, %v319
    %s323 = scalar_lea.vmem [#allocation0], 256
    %v324 = vld [vmem:[%s323] ss:$8 sm:$0xf]
    %s325 = scalar_lea.vmem [#allocation0], 256
    %v326 = vld [vmem:[%s325] ss:$8 sm:$0xf0]
    %vm327 = vcmask 1047556
    %v328 = vsel %vm327, %v326, %v324
    %vm329 = vcmask 523264
    %s330 = scalar_lea.vmem %s1, 32
    %331 = vst.msk [vmem:[%s330] sm:$0xff] %vm329, %v328
    %s332 = scalar_lea.vmem [#allocation0], 320
    %v333 = vld [vmem:[%s332] ss:$8 sm:$0xf]
    %s334 = scalar_lea.vmem [#allocation0], 320
    %v335 = vld [vmem:[%s334] ss:$8 sm:$0xf0]
    %vm336 = vcmask 1047556
    %v337 = vsel %vm336, %v335, %v333
    %vm338 = vcmask 523264
    %s339 = scalar_lea.vmem %s1, 40
    %340 = vst.msk [vmem:[%s339] sm:$0xff] %vm338, %v337
    %s341 = scalar_lea.vmem [#allocation0], 384
    %v342 = vld [vmem:[%s341] ss:$8 sm:$0xf]
    %s343 = scalar_lea.vmem [#allocation0], 384
    %v344 = vld [vmem:[%s343] ss:$8 sm:$0xf0]
    %vm345 = vcmask 1047556
    %v346 = vsel %vm345, %v344, %v342
    %vm347 = vcmask 523264
    %s348 = scalar_lea.vmem %s1, 48
    %349 = vst.msk [vmem:[%s348] sm:$0xff] %vm347, %v346
    %s350 = scalar_lea.vmem [#allocation0], 448
    %v351 = vld [vmem:[%s350] ss:$8 sm:$0xf]
    %s352 = scalar_lea.vmem [#allocation0], 448
    %v353 = vld [vmem:[%s352] ss:$8 sm:$0xf0]
    %vm354 = vcmask 1047556
    %v355 = vsel %vm354, %v353, %v351
    %vm356 = vcmask 523264
    %s357 = scalar_lea.vmem %s1, 56
    %358 = vst.msk [vmem:[%s357] sm:$0xff] %vm356, %v355
    %s359 = scalar_lea.vmem [#allocation0], 512
    %v360 = vld [vmem:[%s359] ss:$8 sm:$0xf]
    %s361 = scalar_lea.vmem [#allocation0], 512
    %v362 = vld [vmem:[%s361] ss:$8 sm:$0xf0]
    %vm363 = vcmask 1047556
    %v364 = vsel %vm363, %v362, %v360
    %vm365 = vcmask 523264
    %s366 = scalar_lea.vmem %s1, 64
    %367 = vst.msk [vmem:[%s366] sm:$0xff] %vm365, %v364
    %s368 = scalar_lea.vmem [#allocation0], 1
    %v369 = vld [vmem:[%s368] ss:$8 sm:$0xf]
    %s370 = scalar_lea.vmem [#allocation0], 1
    %v371 = vld [vmem:[%s370] ss:$8 sm:$0xf0]
    %vm372 = vcmask 1047556
    %v373 = vsel %vm372, %v371, %v369
    %374 = vrot.lane.b32.xlu0 %v373, 64
    %v375 = vpop.permute.xlu0 %374
    %vm376 = vcmask 1048064
    %377 = vst.msk [vmem:[%s1] sm:$0xff] %vm376, %v375
    %s378 = scalar_lea.vmem [#allocation0], 257
    %v379 = vld [vmem:[%s378] ss:$8 sm:$0xf]
    %s380 = scalar_lea.vmem [#allocation0], 257
    %v381 = vld [vmem:[%s380] ss:$8 sm:$0xf0]
    %vm382 = vcmask 1047556
    %v383 = vsel %vm382, %v381, %v379
    %384 = vrot.lane.b32.xlu0 %v383, 64
    %v385 = vpop.permute.xlu0 %384
    %vm386 = vcmask 1048064
    %s387 = scalar_lea.vmem %s1, 32
    %388 = vst.msk [vmem:[%s387] sm:$0xff] %vm386, %v385
    %s389 = scalar_lea.vmem [#allocation0], 513
    %v390 = vld [vmem:[%s389] ss:$8 sm:$0xf]
    %s391 = scalar_lea.vmem [#allocation0], 513
    %v392 = vld [vmem:[%s391] ss:$8 sm:$0xf0]
    %vm393 = vcmask 1047556
    %v394 = vsel %vm393, %v392, %v390
    %395 = vrot.lane.b32.xlu0 %v394, 64
    %v396 = vpop.permute.xlu0 %395
    %vm397 = vcmask 1048064
    %s398 = scalar_lea.vmem %s1, 64
    %399 = vst.msk [vmem:[%s398] sm:$0xff] %vm397, %v396
    %s400 = scalar_lea.vmem [#allocation0], 65
    %v401 = vld [vmem:[%s400] ss:$8 sm:$0xf]
    %s402 = scalar_lea.vmem [#allocation0], 65
    %v403 = vld [vmem:[%s402] ss:$8 sm:$0xf0]
    %vm404 = vcmask 1047556
    %v405 = vsel %vm404, %v403, %v401
    %406 = vrot.lane.b32.xlu0 %v405, 64
    %v407 = vpop.permute.xlu0 %406
    %vm408 = vcmask 1048064
    %s409 = scalar_lea.vmem %s1, 8
    %410 = vst.msk [vmem:[%s409] sm:$0xff] %vm408, %v407
    %s411 = scalar_lea.vmem [#allocation0], 321
    %v412 = vld [vmem:[%s411] ss:$8 sm:$0xf]
    %s413 = scalar_lea.vmem [#allocation0], 321
    %v414 = vld [vmem:[%s413] ss:$8 sm:$0xf0]
    %vm415 = vcmask 1047556
    %v416 = vsel %vm415, %v414, %v412
    %417 = vrot.lane.b32.xlu0 %v416, 64
    %v418 = vpop.permute.xlu0 %417
    %vm419 = vcmask 1048064
    %s420 = scalar_lea.vmem %s1, 40
    %421 = vst.msk [vmem:[%s420] sm:$0xff] %vm419, %v418
    %s422 = scalar_lea.vmem [#allocation0], 129
    %v423 = vld [vmem:[%s422] ss:$8 sm:$0xf]
    %s424 = scalar_lea.vmem [#allocation0], 129
    %v425 = vld [vmem:[%s424] ss:$8 sm:$0xf0]
    %vm426 = vcmask 1047556
    %v427 = vsel %vm426, %v425, %v423
    %428 = vrot.lane.b32.xlu0 %v427, 64
    %v429 = vpop.permute.xlu0 %428
    %vm430 = vcmask 1048064
    %s431 = scalar_lea.vmem %s1, 16
    %432 = vst.msk [vmem:[%s431] sm:$0xff] %vm430, %v429
    %s433 = scalar_lea.vmem [#allocation0], 385
    %v434 = vld [vmem:[%s433] ss:$8 sm:$0xf]
    %s435 = scalar_lea.vmem [#allocation0], 385
    %v436 = vld [vmem:[%s435] ss:$8 sm:$0xf0]
    %vm437 = vcmask 1047556
    %v438 = vsel %vm437, %v436, %v434
    %439 = vrot.lane.b32.xlu0 %v438, 64
    %v440 = vpop.permute.xlu0 %439
    %vm441 = vcmask 1048064
    %s442 = scalar_lea.vmem %s1, 48
    %443 = vst.msk [vmem:[%s442] sm:$0xff] %vm441, %v440
    %s444 = scalar_lea.vmem [#allocation0], 193
    %v445 = vld [vmem:[%s444] ss:$8 sm:$0xf]
    %s446 = scalar_lea.vmem [#allocation0], 193
    %v447 = vld [vmem:[%s446] ss:$8 sm:$0xf0]
    %vm448 = vcmask 1047556
    %v449 = vsel %vm448, %v447, %v445
    %450 = vrot.lane.b32.xlu0 %v449, 64
    %v451 = vpop.permute.xlu0 %450
    %vm452 = vcmask 1048064
    %s453 = scalar_lea.vmem %s1, 24
    %454 = vst.msk [vmem:[%s453] sm:$0xff] %vm452, %v451
    %s455 = scalar_lea.vmem [#allocation0], 449
    %v456 = vld [vmem:[%s455] ss:$8 sm:$0xf]
    %s457 = scalar_lea.vmem [#allocation0], 449
    %v458 = vld [vmem:[%s457] ss:$8 sm:$0xf0]
    %vm459 = vcmask 1047556
    %v460 = vsel %vm459, %v458, %v456
    %461 = vrot.lane.b32.xlu0 %v460, 64
    %v462 = vpop.permute.xlu0 %461
    %vm463 = vcmask 1048064
    %s464 = scalar_lea.vmem %s1, 56
    %465 = vst.msk [vmem:[%s464] sm:$0xff] %vm463, %v462

// kernel: dense_block3_forward.1
$region0: #{dense_block3_forward.1}
  #allocation0 [shape = 'u32[]', space=smem, size = 0x4, offset = 0x4, fixed_abs, tag = 'smem constant byte address 0x4 - core index']
  #allocation1 [shape = 'u32[72,128]{1,0:T(1,128)}', space=vmem, size = 0x9000, scoped, tag = 'internal scratch']
  %s0 = inlined_call_operand.vmem [shape: f32[1,8,512], index: 0, kind: input, shape index: {}]
  %s1 = inlined_call_operand.vmem [shape: f32[72,512], index: 1, kind: input, shape index: {}]
  %s2 = inlined_call_operand.vmem [shape: f32[72,128], index: 2, kind: input, shape index: {}]
  %s3 = inlined_call_operand.vmem [shape: bf16[512,128], index: 3, kind: input, shape index: {}]
  %s4 = inlined_call_operand.vmem [shape: f32[640,128], index: 4, kind: input, shape index: {}]
  %s5 = inlined_call_operand.vmem [shape: f32[1,32,512], index: 5, kind: output, shape index: {0}]
  %s6 = inlined_call_operand.vmem [shape: f32[1,14,2], index: 6, kind: output, shape index: {1}]
  %7 = xla_tuple %s5, %s6
  %s8 = sld [smem:[#allocation0]]
  $region38: #{dense_block3_forward.1} parent=0
    _
  %s10 = ssub.s32 1, %s8
  %s11 = scalar_select 0, %s10, %s8
  // Predicated region
  $region2: #{dense_block3_forward.1} parent=0 // pred_check
    _
  $region3: #{dense_block3_forward.1} parent=0 // pred_check_branch
    %13 = sbr.rel (0) target = $region5
  $region4: #{dense_block3_forward.1} parent=0 // pred_region
    _
  $region5: #{dense_block3_forward.1} parent=0 // pred_fallthru
    _
  // Predicated region
  $region6: #{dense_block3_forward.1} parent=0 // pred_check
    _
  $region7: #{dense_block3_forward.1} parent=0 // pred_check_branch
    %15 = sbr.rel (0) target = $region9
  $region8: #{dense_block3_forward.1} parent=0 // pred_region
    _
  $region9: #{dense_block3_forward.1} parent=0 // pred_fallthru
    _
  // Predicated region
  $region10: #{dense_block3_forward.1} parent=0 // pred_check
    _
  $region11: #{dense_block3_forward.1} parent=0 // pred_check_branch
    %17 = sbr.rel (0) target = $region13
  $region12: #{dense_block3_forward.1} parent=0 // pred_region
    _
  $region13: #{dense_block3_forward.1} parent=0 // pred_fallthru
    _
  // Predicated region
  $region14: #{dense_block3_forward.1} parent=0 // pred_check
    _
  $region15: #{dense_block3_forward.1} parent=0 // pred_check_branch
    %19 = sbr.rel (0) target = $region17
  $region16: #{dense_block3_forward.1} parent=0 // pred_region
    _
  $region17: #{dense_block3_forward.1} parent=0 // pred_fallthru
    _
  // Predicated region
  $region18: #{dense_block3_forward.1} parent=0 // pred_check
    _
  $region19: #{dense_block3_forward.1} parent=0 // pred_check_branch
    %21 = sbr.rel (0) target = $region21
  $region20: #{dense_block3_forward.1} parent=0 // pred_region
    _
  $region21: #{dense_block3_forward.1} parent=0 // pred_fallthru
    _
  %v22 = vld [vmem:[%s0] sm:$0xff]
  %v23 = vld [vmem:[%s0 + $0x8] sm:$0xff]
  %v24 = vld [vmem:[%s0 + $0x10] sm:$0xff]
  %v25 = vld [vmem:[%s0 + $0x18] sm:$0xff]
  %v26 = vld [vmem:[%s1] sm:$0xff]
  %v27 = vld [vmem:[%s1 + $0x8] sm:$0xff]
  %v28 = vld [vmem:[%s1 + $0x10] sm:$0xff]
  %v29 = vld [vmem:[%s1 + $0x18] sm:$0xff]
  %v30 = vld [vmem:[%s1 + $0x20] sm:$0xff]
  %v31 = vld [vmem:[%s1 + $0x28] sm:$0xff]
  %v32 = vld [vmem:[%s1 + $0x30] sm:$0xff]
  %v33 = vld [vmem:[%s1 + $0x38] sm:$0xff]
  %v34 = vld [vmem:[%s1 + $0x40] sm:$0xff]
  %v35 = vld [vmem:[%s1 + $0x48] sm:$0xff]
  %v36 = vld [vmem:[%s1 + $0x50] sm:$0xff]
  %v37 = vld [vmem:[%s1 + $0x58] sm:$0xff]
  %v38 = vld [vmem:[%s1 + $0x60] sm:$0xff]
  %v39 = vld [vmem:[%s1 + $0x68] sm:$0xff]
  %v40 = vld [vmem:[%s1 + $0x70] sm:$0xff]
  %v41 = vld [vmem:[%s1 + $0x78] sm:$0xff]
  %v42 = vld [vmem:[%s1 + $0x80] sm:$0xff]
  %v43 = vld [vmem:[%s1 + $0x88] sm:$0xff]
  %v44 = vld [vmem:[%s1 + $0x90] sm:$0xff]
  %v45 = vld [vmem:[%s1 + $0x98] sm:$0xff]
  %v46 = vld [vmem:[%s1 + $0xa0] sm:$0xff]
  %v47 = vld [vmem:[%s1 + $0xa8] sm:$0xff]
  %v48 = vld [vmem:[%s1 + $0xb0] sm:$0xff]
  %v49 = vld [vmem:[%s1 + $0xb8] sm:$0xff]
  %v50 = vld [vmem:[%s1 + $0xc0] sm:$0xff]
  %v51 = vld [vmem:[%s1 + $0xc8] sm:$0xff]
  %v52 = vld [vmem:[%s1 + $0xd0] sm:$0xff]
  %v53 = vld [vmem:[%s1 + $0xd8] sm:$0xff]
  %v54 = vld [vmem:[%s1 + $0xe0] sm:$0xff]
  %v55 = vld [vmem:[%s1 + $0xe8] sm:$0xff]
  %v56 = vld [vmem:[%s1 + $0xf0] sm:$0xff]
  %v57 = vld [vmem:[%s1 + $0xf8] sm:$0xff]
  %v58 = vld [vmem:[%s1 + $0x100] sm:$0xff]
  %v59 = vld [vmem:[%s1 + $0x108] sm:$0xff]
  %v60 = vld [vmem:[%s1 + $0x110] sm:$0xff]
  %v61 = vld [vmem:[%s1 + $0x118] sm:$0xff]
  %v62 = vld [vmem:[%s2] sm:$0xff]
  %v63 = vld [vmem:[%s2 + $0x8] sm:$0xff]
  %v64 = vld [vmem:[%s2 + $0x10] sm:$0xff]
  %v65 = vld [vmem:[%s2 + $0x18] sm:$0xff]
  %v66 = vld [vmem:[%s2 + $0x20] sm:$0xff]
  %v67 = vld [vmem:[%s2 + $0x28] sm:$0xff]
  %v68 = vld [vmem:[%s2 + $0x30] sm:$0xff]
  %v69 = vld [vmem:[%s2 + $0x38] sm:$0xff]
  %v70 = vld [vmem:[%s2 + $0x40] sm:$0xff]
  %v71 = vld [vmem:[%s4] sm:$0xff]
  %v72 = vld [vmem:[%s4 + $0x8] sm:$0xff]
  %73 = vrot.lane.b32.xlu0 %v22, 17
  %v74 = vpop.permute.xlu0 %73
  %75 = vrot.lane.b32.xlu0 %v23, 17
  %v76 = vpop.permute.xlu0 %75
  %77 = vrot.lane.b32.xlu0 %v24, 17
  %v78 = vpop.permute.xlu0 %77
  %79 = vrot.lane.b32.xlu0 %v25, 17
  %v80 = vpop.permute.xlu0 %79
  %v81 = vlaneseq
  %v82 = vand.u32 %v81, 127
  %vm83 = vcmp.lt.s32.totalorder %v82, 17
  %v84 = vsel %vm83, %v78, %v80
  %v85 = vsel %vm83, %v76, %v78
  %v86 = vsel %vm83, %v74, %v76
  %v87 = vsel %vm83, %v80, %v74
  %88 = vrot.lane.b32.xlu0 %v22, 16
  %v89 = vpop.permute.xlu0 %88
  %90 = vrot.lane.b32.xlu0 %v23, 16
  %v91 = vpop.permute.xlu0 %90
  %92 = vrot.lane.b32.xlu0 %v24, 16
  %v93 = vpop.permute.xlu0 %92
  %94 = vrot.lane.b32.xlu0 %v25, 16
  %v95 = vpop.permute.xlu0 %94
  %vm96 = vcmp.lt.s32.totalorder %v82, 16
  %v97 = vsel %vm96, %v93, %v95
  %v98 = vsel %vm96, %v91, %v93
  %v99 = vsel %vm96, %v89, %v91
  %v100 = vsel %vm96, %v95, %v89
  %101 = vrot.lane.b32.xlu0 %v22, 15
  %v102 = vpop.permute.xlu0 %101
  %103 = vrot.lane.b32.xlu0 %v23, 15
  %v104 = vpop.permute.xlu0 %103
  %105 = vrot.lane.b32.xlu0 %v24, 15
  %v106 = vpop.permute.xlu0 %105
  %107 = vrot.lane.b32.xlu0 %v25, 15
  %v108 = vpop.permute.xlu0 %107
  %vm109 = vcmp.lt.s32.totalorder %v82, 15
  %v110 = vsel %vm109, %v106, %v108
  %v111 = vsel %vm109, %v104, %v106
  %v112 = vsel %vm109, %v102, %v104
  %v113 = vsel %vm109, %v108, %v102
  %114 = vrot.lane.b32.xlu0 %v22, 1
  %v115 = vpop.permute.xlu0 %114
  %116 = vrot.lane.b32.xlu0 %v23, 1
  %v117 = vpop.permute.xlu0 %116
  %118 = vrot.lane.b32.xlu0 %v24, 1
  %v119 = vpop.permute.xlu0 %118
  %120 = vrot.lane.b32.xlu0 %v25, 1
  %v121 = vpop.permute.xlu0 %120
  %vm122 = vcmp.lt.s32.totalorder %v82, 1
  %v123 = vsel %vm122, %v119, %v121
  %v124 = vsel %vm122, %v117, %v119
  %v125 = vsel %vm122, %v115, %v117
  %v126 = vsel %vm122, %v121, %v115
  %127 = vrot.lane.b32.xlu0 %v22, 127
  %v128 = vpop.permute.xlu0 %127
  %129 = vrot.lane.b32.xlu0 %v23, 127
  %v130 = vpop.permute.xlu0 %129
  %131 = vrot.lane.b32.xlu0 %v24, 127
  %v132 = vpop.permute.xlu0 %131
  %133 = vrot.lane.b32.xlu0 %v25, 127
  %v134 = vpop.permute.xlu0 %133
  %vm135 = vcmp.lt.s32.totalorder %v82, 127
  %v136 = vsel %vm135, %v132, %v134
  %v137 = vsel %vm135, %v130, %v132
  %v138 = vsel %vm135, %v128, %v130
  %v139 = vsel %vm135, %v134, %v128
  %140 = vrot.lane.b32.xlu0 %v22, 113
  %v141 = vpop.permute.xlu0 %140
  %142 = vrot.lane.b32.xlu0 %v23, 113
  %v143 = vpop.permute.xlu0 %142
  %144 = vrot.lane.b32.xlu0 %v24, 113
  %v145 = vpop.permute.xlu0 %144
  %146 = vrot.lane.b32.xlu0 %v25, 113
  %v147 = vpop.permute.xlu0 %146
  %vm148 = vcmp.lt.s32.totalorder %v82, 113
  %v149 = vsel %vm148, %v145, %v147
  %v150 = vsel %vm148, %v143, %v145
  %v151 = vsel %vm148, %v141, %v143
  %v152 = vsel %vm148, %v147, %v141
  %153 = vrot.lane.b32.xlu0 %v22, 112
  %v154 = vpop.permute.xlu0 %153
  %155 = vrot.lane.b32.xlu0 %v23, 112
  %v156 = vpop.permute.xlu0 %155
  %157 = vrot.lane.b32.xlu0 %v24, 112
  %v158 = vpop.permute.xlu0 %157
  %159 = vrot.lane.b32.xlu0 %v25, 112
  %v160 = vpop.permute.xlu0 %159
  %vm161 = vcmp.lt.s32.totalorder %v82, 112
  %v162 = vsel %vm161, %v158, %v160
  %v163 = vsel %vm161, %v156, %v158
  %v164 = vsel %vm161, %v154, %v156
  %v165 = vsel %vm161, %v160, %v154
  %166 = vrot.lane.b32.xlu0 %v22, 111
  %v167 = vpop.permute.xlu0 %166
  %168 = vrot.lane.b32.xlu0 %v23, 111
  %v169 = vpop.permute.xlu0 %168
  %170 = vrot.lane.b32.xlu0 %v24, 111
  %v171 = vpop.permute.xlu0 %170
  %172 = vrot.lane.b32.xlu0 %v25, 111
  %v173 = vpop.permute.xlu0 %172
  %vm174 = vcmp.lt.s32.totalorder %v82, 111
  %v175 = vsel %vm174, %v171, %v173
  %v176 = vsel %vm174, %v169, %v171
  %v177 = vsel %vm174, %v167, %v169
  %v178 = vsel %vm174, %v173, %v167
  %v179 = vmul.f32 %v87, %v26
  %v180 = vmul.f32 %v86, %v27
  %v181 = vmul.f32 %v85, %v28
  %v182 = vmul.f32 %v84, %v29
  %v183 = vmul.f32 %v100, %v30
  %v184 = vmul.f32 %v99, %v31
  %v185 = vmul.f32 %v98, %v32
  %v186 = vmul.f32 %v97, %v33
  %v187 = vmul.f32 %v113, %v34
  %v188 = vmul.f32 %v112, %v35
  %v189 = vmul.f32 %v111, %v36
  %v190 = vmul.f32 %v110, %v37
  %v191 = vmul.f32 %v126, %v38
  %v192 = vmul.f32 %v125, %v39
  %v193 = vmul.f32 %v124, %v40
  %v194 = vmul.f32 %v123, %v41
  %v195 = vmul.f32 %v22, %v42
  %v196 = vmul.f32 %v23, %v43
  %v197 = vmul.f32 %v24, %v44
  %v198 = vmul.f32 %v25, %v45
  %v199 = vmul.f32 %v138, %v46
  %v200 = vmul.f32 %v137, %v47
  %v201 = vmul.f32 %v136, %v48
  %v202 = vmul.f32 %v139, %v49
  %v203 = vmul.f32 %v151, %v50
  %v204 = vmul.f32 %v150, %v51
  %v205 = vmul.f32 %v149, %v52
  %v206 = vmul.f32 %v152, %v53
  %v207 = vmul.f32 %v164, %v54
  %v208 = vmul.f32 %v163, %v55
  %v209 = vmul.f32 %v162, %v56
  %v210 = vmul.f32 %v165, %v57
  %v211 = vmul.f32 %v177, %v58
  %v212 = vmul.f32 %v176, %v59
  %v213 = vmul.f32 %v175, %v60
  %v214 = vmul.f32 %v178, %v61
  %vm215 = vcmask 588800
  %v217 = vsel %vm215, %v71, 0
  %v220 = vsel %vm215, %v72, 0
  %222 = vmatpush.msra.mxu0 0.0
  %223 = vmatpush.msra.mxu0 0.0
  %224 = vmatpush.msra.mxu0 0.0
  %225 = vmatpush.msra.mxu0 0.0
  %226 = vmatpush.msra.mxu0 0.0
  %227 = vmatpush.msra.mxu0 0.0
  %228 = vmatpush.msra.mxu0 0.0
  %229 = vmatpush.msra.mxu0 %v211
  %230 = vmatpush.msra.mxu0 %v207
  %231 = vmatpush.msra.mxu0 %v203
  %232 = vmatpush.msra.mxu0 %v199
  %233 = vmatpush.msra.mxu0 %v195
  %234 = vmatpush.msra.mxu0 %v191
  %235 = vmatpush.msra.mxu0 %v187
  %236 = vmatpush.msra.mxu0 %v183
  %237 = vmatpush.msra.mxu0 %v179
  %238 = vmatmul.f32.gmra.mxu0 %v217
  %v239 = vpop.f32.mrf.mxu0
  %v240 = vadd.f32 0.0, %v239
  %241 = vmatmul.f32.gmra.mxu0 %v220
  %v242 = vpop.f32.mrf.mxu0
  %v243 = vadd.f32 0.0, %v242
  %244 = vdwg.mxu0
  %245 = vmatpush.msra.mxu0 0.0
  %246 = vmatpush.msra.mxu0 0.0
  %247 = vmatpush.msra.mxu0 0.0
  %248 = vmatpush.msra.mxu0 0.0
  %249 = vmatpush.msra.mxu0 0.0
  %250 = vmatpush.msra.mxu0 0.0
  %251 = vmatpush.msra.mxu0 0.0
  %252 = vmatpush.msra.mxu0 %v212
  %253 = vmatpush.msra.mxu0 %v208
  %254 = vmatpush.msra.mxu0 %v204
  %255 = vmatpush.msra.mxu0 %v200
  %256 = vmatpush.msra.mxu0 %v196
  %257 = vmatpush.msra.mxu0 %v192
  %258 = vmatpush.msra.mxu0 %v188
  %259 = vmatpush.msra.mxu0 %v184
  %260 = vmatpush.msra.mxu0 %v180
  %261 = vmatmul.f32.gmra.mxu0 %v217
  %v262 = vpop.f32.mrf.mxu0
  %v263 = vadd.f32 0.0, %v262
  %264 = vmatmul.f32.gmra.mxu0 %v220
  %v265 = vpop.f32.mrf.mxu0
  %v266 = vadd.f32 0.0, %v265
  %267 = vdwg.mxu0
  %268 = vmatpush.msra.mxu0 0.0
  %269 = vmatpush.msra.mxu0 0.0
  %270 = vmatpush.msra.mxu0 0.0
  %271 = vmatpush.msra.mxu0 0.0
  %272 = vmatpush.msra.mxu0 0.0
  %273 = vmatpush.msra.mxu0 0.0
  %274 = vmatpush.msra.mxu0 0.0
  %275 = vmatpush.msra.mxu0 %v213
  %276 = vmatpush.msra.mxu0 %v209
  %277 = vmatpush.msra.mxu0 %v205
  %278 = vmatpush.msra.mxu0 %v201
  %279 = vmatpush.msra.mxu0 %v197
  %280 = vmatpush.msra.mxu0 %v193
  %281 = vmatpush.msra.mxu0 %v189
  %282 = vmatpush.msra.mxu0 %v185
  %283 = vmatpush.msra.mxu0 %v181
  %284 = vmatmul.f32.gmra.mxu0 %v217
  %v285 = vpop.f32.mrf.mxu0
  %v286 = vadd.f32 0.0, %v285
  %287 = vmatmul.f32.gmra.mxu0 %v220
  %v288 = vpop.f32.mrf.mxu0
  %v289 = vadd.f32 0.0, %v288
  %290 = vdwg.mxu0
  %291 = vmatpush.msra.mxu0 0.0
  %292 = vmatpush.msra.mxu0 0.0
  %293 = vmatpush.msra.mxu0 0.0
  %294 = vmatpush.msra.mxu0 0.0
  %295 = vmatpush.msra.mxu0 0.0
  %296 = vmatpush.msra.mxu0 0.0
  %297 = vmatpush.msra.mxu0 0.0
  %298 = vmatpush.msra.mxu0 %v214
  %299 = vmatpush.msra.mxu0 %v210
  %300 = vmatpush.msra.mxu0 %v206
  %301 = vmatpush.msra.mxu0 %v202
  %302 = vmatpush.msra.mxu0 %v198
  %303 = vmatpush.msra.mxu0 %v194
  %304 = vmatpush.msra.mxu0 %v190
  %305 = vmatpush.msra.mxu0 %v186
  %306 = vmatpush.msra.mxu0 %v182
  %307 = vmatmul.f32.gmra.mxu0 %v217
  %v308 = vpop.f32.mrf.mxu0
  %v309 = vadd.f32 0.0, %v308
  %310 = vmatmul.f32.gmra.mxu0 %v220
  %v311 = vpop.f32.mrf.mxu0
  %v312 = vadd.f32 0.0, %v311
  %313 = vdwg.mxu0
  %v314 = vld [vmem:[%s4 + $0x10] sm:$0xff]
  %v315 = vld [vmem:[%s4 + $0x18] sm:$0xff]
  %v316 = vld [vmem:[%s4 + $0x20] sm:$0xff]
  %v317 = vld [vmem:[%s4 + $0x28] sm:$0xff]
  %319 = vset.pattern.permute.xlu0 0
  %320 = vperm.xlu0 %319, %v314
  %v321 = vpop.permute.xlu0 %320
  %324 = vset.pattern.permute.xlu0 0
  %325 = vperm.xlu0 %324, %v315
  %v326 = vpop.permute.xlu0 %325
  %v328 = vmul.f32 %v240, %v321
  %v329 = vmul.f32 %v263, %v321
  %v330 = vmul.f32 %v286, %v321
  %v331 = vmul.f32 %v309, %v321
  %v332 = vmul.f32 %v243, %v326
  %v333 = vmul.f32 %v266, %v326
  %v334 = vmul.f32 %v289, %v326
  %v335 = vmul.f32 %v312, %v326
  %337 = vset.pattern.permute.xlu0 0
  %338 = vperm.xlu0 %337, %v316
  %v339 = vpop.permute.xlu0 %338
  %342 = vset.pattern.permute.xlu0 0
  %343 = vperm.xlu0 %342, %v317
  %v344 = vpop.permute.xlu0 %343
  %v346 = vadd.f32 %v328, %v339
  %v347 = vadd.f32 %v329, %v339
  %v348 = vadd.f32 %v330, %v339
  %v349 = vadd.f32 %v331, %v339
  %v350 = vadd.f32 %v332, %v344
  %v351 = vadd.f32 %v333, %v344
  %v352 = vadd.f32 %v334, %v344
  %v353 = vadd.f32 %v335, %v344
  %v354 = vmax.f32 %v346, 0.0
  %v355 = vmax.f32 %v347, 0.0
  %v356 = vmax.f32 %v348, 0.0
  %v357 = vmax.f32 %v349, 0.0
  %v358 = vmax.f32 %v350, 0.0
  %v359 = vmax.f32 %v351, 0.0
  %v360 = vmax.f32 %v352, 0.0
  %v361 = vmax.f32 %v353, 0.0
  %v362 = vld [vmem:[%s4 + $0x30] sm:$0xff]
  %v363 = vld [vmem:[%s4 + $0x38] sm:$0xff]
  %v364 = vld [vmem:[%s4 + $0x40] sm:$0xff]
  %v365 = vld [vmem:[%s4 + $0x48] sm:$0xff]
  %367 = vset.pattern.permute.xlu0 0
  %368 = vperm.xlu0 %367, %v362
  %v369 = vpop.permute.xlu0 %368
  %372 = vset.pattern.permute.xlu0 0
  %373 = vperm.xlu0 %372, %v363
  %v374 = vpop.permute.xlu0 %373
  %v376 = vmul.f32 %v354, %v369
  %v377 = vmul.f32 %v355, %v369
  %v378 = vmul.f32 %v356, %v369
  %v379 = vmul.f32 %v357, %v369
  %v380 = vmul.f32 %v358, %v374
  %v381 = vmul.f32 %v359, %v374
  %v382 = vmul.f32 %v360, %v374
  %v383 = vmul.f32 %v361, %v374
  %385 = vset.pattern.permute.xlu0 0
  %386 = vperm.xlu0 %385, %v364
  %v387 = vpop.permute.xlu0 %386
  %390 = vset.pattern.permute.xlu0 0
  %391 = vperm.xlu0 %390, %v365
  %v392 = vpop.permute.xlu0 %391
  %v394 = vadd.f32 %v376, %v387
  %v395 = vadd.f32 %v377, %v387
  %v396 = vadd.f32 %v378, %v387
  %v397 = vadd.f32 %v379, %v387
  %v398 = vadd.f32 %v380, %v392
  %v399 = vadd.f32 %v381, %v392
  %v400 = vadd.f32 %v382, %v392
  %v401 = vadd.f32 %v383, %v392
  %v402 = vmax.f32 %v394, 0.0
  %v403 = vmax.f32 %v395, 0.0
  %v404 = vmax.f32 %v396, 0.0
  %v405 = vmax.f32 %v397, 0.0
  %v406 = vmax.f32 %v398, 0.0
  %v407 = vmax.f32 %v399, 0.0
  %v408 = vmax.f32 %v400, 0.0
  %v409 = vmax.f32 %v401, 0.0
  %v410 = vld [vmem:[%s4 + $0x50] sm:$0xff]
  %vm411 = vcmask 130048
  %v413 = vsel %vm411, %v410, 0
  %415 = vmatpush.msra.mxu0 0.0
  %416 = vmatpush.msra.mxu0 0.0
  %417 = vmatpush.msra.mxu0 0.0
  %418 = vmatpush.msra.mxu0 0.0
  %419 = vmatpush.msra.mxu0 0.0
  %420 = vmatpush.msra.mxu0 0.0
  %421 = vmatpush.msra.mxu0 0.0
  %422 = vmatpush.msra.mxu0 0.0
  %423 = vmatpush.msra.mxu0 0.0
  %424 = vmatpush.msra.mxu0 0.0
  %425 = vmatpush.msra.mxu0 0.0
  %426 = vmatpush.msra.mxu0 0.0
  %427 = vmatpush.msra.mxu0 0.0
  %428 = vmatpush.msra.mxu0 0.0
  %429 = vmatpush.msra.mxu0 %v406
  %430 = vmatpush.msra.mxu0 %v402
  %431 = vmatmul.f32.gmra.mxu0 %v413
  %v432 = vpop.f32.mrf.mxu0
  %v433 = vadd.f32 0.0, %v432
  %434 = vdwg.mxu0
  %435 = vmatpush.msra.mxu0 0.0
  %436 = vmatpush.msra.mxu0 0.0
  %437 = vmatpush.msra.mxu0 0.0
  %438 = vmatpush.msra.mxu0 0.0
  %439 = vmatpush.msra.mxu0 0.0
  %440 = vmatpush.msra.mxu0 0.0
  %441 = vmatpush.msra.mxu0 0.0
  %442 = vmatpush.msra.mxu0 0.0
  %443 = vmatpush.msra.mxu0 0.0
  %444 = vmatpush.msra.mxu0 0.0
  %445 = vmatpush.msra.mxu0 0.0
  %446 = vmatpush.msra.mxu0 0.0
  %447 = vmatpush.msra.mxu0 0.0
  %448 = vmatpush.msra.mxu0 0.0
  %449 = vmatpush.msra.mxu0 %v407
  %450 = vmatpush.msra.mxu0 %v403
  %451 = vmatmul.f32.gmra.mxu0 %v413
  %v452 = vpop.f32.mrf.mxu0
  %v453 = vadd.f32 0.0, %v452
  %454 = vdwg.mxu0
  %455 = vmatpush.msra.mxu0 0.0
  %456 = vmatpush.msra.mxu0 0.0
  %457 = vmatpush.msra.mxu0 0.0
  %458 = vmatpush.msra.mxu0 0.0
  %459 = vmatpush.msra.mxu0 0.0
  %460 = vmatpush.msra.mxu0 0.0
  %461 = vmatpush.msra.mxu0 0.0
  %462 = vmatpush.msra.mxu0 0.0
  %463 = vmatpush.msra.mxu0 0.0
  %464 = vmatpush.msra.mxu0 0.0
  %465 = vmatpush.msra.mxu0 0.0
  %466 = vmatpush.msra.mxu0 0.0
  %467 = vmatpush.msra.mxu0 0.0
  %468 = vmatpush.msra.mxu0 0.0
  %469 = vmatpush.msra.mxu0 %v408
  %470 = vmatpush.msra.mxu0 %v404
  %471 = vmatmul.f32.gmra.mxu0 %v413
  %v472 = vpop.f32.mrf.mxu0
  %v473 = vadd.f32 0.0, %v472
  %474 = vdwg.mxu0
  %475 = vmatpush.msra.mxu0 0.0
  %476 = vmatpush.msra.mxu0 0.0
  %477 = vmatpush.msra.mxu0 0.0
  %478 = vmatpush.msra.mxu0 0.0
  %479 = vmatpush.msra.mxu0 0.0
  %480 = vmatpush.msra.mxu0 0.0
  %481 = vmatpush.msra.mxu0 0.0
  %482 = vmatpush.msra.mxu0 0.0
  %483 = vmatpush.msra.mxu0 0.0
  %484 = vmatpush.msra.mxu0 0.0
  %485 = vmatpush.msra.mxu0 0.0
  %486 = vmatpush.msra.mxu0 0.0
  %487 = vmatpush.msra.mxu0 0.0
  %488 = vmatpush.msra.mxu0 0.0
  %489 = vmatpush.msra.mxu0 %v409
  %490 = vmatpush.msra.mxu0 %v405
  %491 = vmatmul.f32.gmra.mxu0 %v413
  %v492 = vpop.f32.mrf.mxu0
  %v493 = vadd.f32 0.0, %v492
  %494 = vdwg.mxu0
  %v495 = vld [vmem:[%s4 + $0x58] sm:$0xff]
  %v496 = vld [vmem:[%s4 + $0x60] sm:$0xff]
  %498 = vset.pattern.permute.xlu0 0
  %499 = vperm.xlu0 %498, %v495
  %v500 = vpop.permute.xlu0 %499
  %v502 = vmul.f32 %v433, %v500
  %v503 = vmul.f32 %v453, %v500
  %v504 = vmul.f32 %v473, %v500
  %v505 = vmul.f32 %v493, %v500
  %507 = vset.pattern.permute.xlu0 0
  %508 = vperm.xlu0 %507, %v496
  %v509 = vpop.permute.xlu0 %508
  %v511 = vadd.f32 %v502, %v509
  %v512 = vadd.f32 %v503, %v509
  %v513 = vadd.f32 %v504, %v509
  %v514 = vadd.f32 %v505, %v509
  %v515 = vmax.f32 %v511, 0.0
  %v516 = vmax.f32 %v512, 0.0
  %v517 = vmax.f32 %v513, 0.0
  %v518 = vmax.f32 %v514, 0.0
  %v519 = vld [vmem:[%s4 + $0x68] sm:$0xff]
  %520 = vrot.lane.b32.xlu0 %v515, 17
  %v521 = vpop.permute.xlu0 %520
  %522 = vrot.lane.b32.xlu0 %v516, 17
  %v523 = vpop.permute.xlu0 %522
  %524 = vrot.lane.b32.xlu0 %v517, 17
  %v525 = vpop.permute.xlu0 %524
  %526 = vrot.lane.b32.xlu0 %v518, 17
  %v527 = vpop.permute.xlu0 %526
  %v528 = vsel %vm83, %v525, %v527
  %v529 = vsel %vm83, %v523, %v525
  %v530 = vsel %vm83, %v521, %v523
  %v531 = vsel %vm83, %v527, %v521
  %532 = vrot.lane.b32.xlu0 %v515, 16
  %v533 = vpop.permute.xlu0 %532
  %534 = vrot.lane.b32.xlu0 %v516, 16
  %v535 = vpop.permute.xlu0 %534
  %536 = vrot.lane.b32.xlu0 %v517, 16
  %v537 = vpop.permute.xlu0 %536
  %538 = vrot.lane.b32.xlu0 %v518, 16
  %v539 = vpop.permute.xlu0 %538
  %v540 = vsel %vm96, %v537, %v539
  %v541 = vsel %vm96, %v535, %v537
  %v542 = vsel %vm96, %v533, %v535
  %v543 = vsel %vm96, %v539, %v533
  %544 = vrot.lane.b32.xlu0 %v515, 15
  %v545 = vpop.permute.xlu0 %544
  %546 = vrot.lane.b32.xlu0 %v516, 15
  %v547 = vpop.permute.xlu0 %546
  %548 = vrot.lane.b32.xlu0 %v517, 15
  %v549 = vpop.permute.xlu0 %548
  %550 = vrot.lane.b32.xlu0 %v518, 15
  %v551 = vpop.permute.xlu0 %550
  %v552 = vsel %vm109, %v549, %v551
  %v553 = vsel %vm109, %v547, %v549
  %v554 = vsel %vm109, %v545, %v547
  %v555 = vsel %vm109, %v551, %v545
  %556 = vrot.lane.b32.xlu0 %v515, 1
  %v557 = vpop.permute.xlu0 %556
  %558 = vrot.lane.b32.xlu0 %v516, 1
  %v559 = vpop.permute.xlu0 %558
  %560 = vrot.lane.b32.xlu0 %v517, 1
  %v561 = vpop.permute.xlu0 %560
  %562 = vrot.lane.b32.xlu0 %v518, 1
  %v563 = vpop.permute.xlu0 %562
  %v564 = vsel %vm122, %v561, %v563
  %v565 = vsel %vm122, %v559, %v561
  %v566 = vsel %vm122, %v557, %v559
  %v567 = vsel %vm122, %v563, %v557
  %568 = vrot.lane.b32.xlu0 %v515, 127
  %v569 = vpop.permute.xlu0 %568
  %570 = vrot.lane.b32.xlu0 %v516, 127
  %v571 = vpop.permute.xlu0 %570
  %572 = vrot.lane.b32.xlu0 %v517, 127
  %v573 = vpop.permute.xlu0 %572
  %574 = vrot.lane.b32.xlu0 %v518, 127
  %v575 = vpop.permute.xlu0 %574
  %v576 = vsel %vm135, %v573, %v575
  %v577 = vsel %vm135, %v571, %v573
  %v578 = vsel %vm135, %v569, %v571
  %v579 = vsel %vm135, %v575, %v569
  %580 = vrot.lane.b32.xlu0 %v515, 113
  %v581 = vpop.permute.xlu0 %580
  %582 = vrot.lane.b32.xlu0 %v516, 113
  %v583 = vpop.permute.xlu0 %582
  %584 = vrot.lane.b32.xlu0 %v517, 113
  %v585 = vpop.permute.xlu0 %584
  %586 = vrot.lane.b32.xlu0 %v518, 113
  %v587 = vpop.permute.xlu0 %586
  %v588 = vsel %vm148, %v585, %v587
  %v589 = vsel %vm148, %v583, %v585
  %v590 = vsel %vm148, %v581, %v583
  %v591 = vsel %vm148, %v587, %v581
  %592 = vrot.lane.b32.xlu0 %v515, 112
  %v593 = vpop.permute.xlu0 %592
  %594 = vrot.lane.b32.xlu0 %v516, 112
  %v595 = vpop.permute.xlu0 %594
  %596 = vrot.lane.b32.xlu0 %v517, 112
  %v597 = vpop.permute.xlu0 %596
  %598 = vrot.lane.b32.xlu0 %v518, 112
  %v599 = vpop.permute.xlu0 %598
  %v600 = vsel %vm161, %v597, %v599
  %v601 = vsel %vm161, %v595, %v597
  %v602 = vsel %vm161, %v593, %v595
  %v603 = vsel %vm161, %v599, %v593
  %604 = vrot.lane.b32.xlu0 %v515, 111
  %v605 = vpop.permute.xlu0 %604
  %606 = vrot.lane.b32.xlu0 %v516, 111
  %v607 = vpop.permute.xlu0 %606
  %608 = vrot.lane.b32.xlu0 %v517, 111
  %v609 = vpop.permute.xlu0 %608
  %610 = vrot.lane.b32.xlu0 %v518, 111
  %v611 = vpop.permute.xlu0 %610
  %v612 = vsel %vm174, %v609, %v611
  %v613 = vsel %vm174, %v607, %v609
  %v614 = vsel %vm174, %v605, %v607
  %v615 = vsel %vm174, %v611, %v605
  %v616 = vmul.f32 %v531, %v26
  %v617 = vmul.f32 %v530, %v27
  %v618 = vmul.f32 %v529, %v28
  %v619 = vmul.f32 %v528, %v29
  %v620 = vmul.f32 %v543, %v30
  %v621 = vmul.f32 %v542, %v31
  %v622 = vmul.f32 %v541, %v32
  %v623 = vmul.f32 %v540, %v33
  %v624 = vmul.f32 %v555, %v34
  %v625 = vmul.f32 %v554, %v35
  %v626 = vmul.f32 %v553, %v36
  %v627 = vmul.f32 %v552, %v37
  %v628 = vmul.f32 %v567, %v38
  %v629 = vmul.f32 %v566, %v39
  %v630 = vmul.f32 %v565, %v40
  %v631 = vmul.f32 %v564, %v41
  %v632 = vmul.f32 %v515, %v42
  %v633 = vmul.f32 %v516, %v43
  %v634 = vmul.f32 %v517, %v44
  %v635 = vmul.f32 %v518, %v45
  %v636 = vmul.f32 %v578, %v46
  %v637 = vmul.f32 %v577, %v47
  %v638 = vmul.f32 %v576, %v48
  %v639 = vmul.f32 %v579, %v49
  %v640 = vmul.f32 %v590, %v50
  %v641 = vmul.f32 %v589, %v51
  %v642 = vmul.f32 %v588, %v52
  %v643 = vmul.f32 %v591, %v53
  %v644 = vmul.f32 %v602, %v54
  %v645 = vmul.f32 %v601, %v55
  %v646 = vmul.f32 %v600, %v56
  %v647 = vmul.f32 %v603, %v57
  %v648 = vmul.f32 %v614, %v58
  %v649 = vmul.f32 %v613, %v59
  %v650 = vmul.f32 %v612, %v60
  %v651 = vmul.f32 %v615, %v61
  %v653 = vsel %vm215, %v519, 0
  %655 = vmatpush.msra.mxu0 0.0
  %656 = vmatpush.msra.mxu0 0.0
  %657 = vmatpush.msra.mxu0 0.0
  %658 = vmatpush.msra.mxu0 0.0
  %659 = vmatpush.msra.mxu0 0.0
  %660 = vmatpush.msra.mxu0 0.0
  %661 = vmatpush.msra.mxu0 0.0
  %662 = vmatpush.msra.mxu0 %v648
  %663 = vmatpush.msra.mxu0 %v644
  %664 = vmatpush.msra.mxu0 %v640
  %665 = vmatpush.msra.mxu0 %v636
  %666 = vmatpush.msra.mxu0 %v632
  %667 = vmatpush.msra.mxu0 %v628
  %668 = vmatpush.msra.mxu0 %v624
  %669 = vmatpush.msra.mxu0 %v620
  %670 = vmatpush.msra.mxu0 %v616
  %671 = vmatmul.f32.gmra.mxu0 %v653
  %v672 = vpop.f32.mrf.mxu0
  %v673 = vadd.f32 0.0, %v672
  %674 = vdwg.mxu0
  %675 = vmatpush.msra.mxu0 0.0
  %676 = vmatpush.msra.mxu0 0.0
  %677 = vmatpush.msra.mxu0 0.0
  %678 = vmatpush.msra.mxu0 0.0
  %679 = vmatpush.msra.mxu0 0.0
  %680 = vmatpush.msra.mxu0 0.0
  %681 = vmatpush.msra.mxu0 0.0
  %682 = vmatpush.msra.mxu0 %v649
  %683 = vmatpush.msra.mxu0 %v645
  %684 = vmatpush.msra.mxu0 %v641
  %685 = vmatpush.msra.mxu0 %v637
  %686 = vmatpush.msra.mxu0 %v633
  %687 = vmatpush.msra.mxu0 %v629
  %688 = vmatpush.msra.mxu0 %v625
  %689 = vmatpush.msra.mxu0 %v621
  %690 = vmatpush.msra.mxu0 %v617
  %691 = vmatmul.f32.gmra.mxu0 %v653
  %v692 = vpop.f32.mrf.mxu0
  %v693 = vadd.f32 0.0, %v692
  %694 = vdwg.mxu0
  %695 = vmatpush.msra.mxu0 0.0
  %696 = vmatpush.msra.mxu0 0.0
  %697 = vmatpush.msra.mxu0 0.0
  %698 = vmatpush.msra.mxu0 0.0
  %699 = vmatpush.msra.mxu0 0.0
  %700 = vmatpush.msra.mxu0 0.0
  %701 = vmatpush.msra.mxu0 0.0
  %702 = vmatpush.msra.mxu0 %v650
  %703 = vmatpush.msra.mxu0 %v646
  %704 = vmatpush.msra.mxu0 %v642
  %705 = vmatpush.msra.mxu0 %v638
  %706 = vmatpush.msra.mxu0 %v634
  %707 = vmatpush.msra.mxu0 %v630
  %708 = vmatpush.msra.mxu0 %v626
  %709 = vmatpush.msra.mxu0 %v622
  %710 = vmatpush.msra.mxu0 %v618
  %711 = vmatmul.f32.gmra.mxu0 %v653
  %v712 = vpop.f32.mrf.mxu0
  %v713 = vadd.f32 0.0, %v712
  %714 = vdwg.mxu0
  %715 = vmatpush.msra.mxu0 0.0
  %716 = vmatpush.msra.mxu0 0.0
  %717 = vmatpush.msra.mxu0 0.0
  %718 = vmatpush.msra.mxu0 0.0
  %719 = vmatpush.msra.mxu0 0.0
  %720 = vmatpush.msra.mxu0 0.0
  %721 = vmatpush.msra.mxu0 0.0
  %722 = vmatpush.msra.mxu0 %v651
  %723 = vmatpush.msra.mxu0 %v647
  %724 = vmatpush.msra.mxu0 %v643
  %725 = vmatpush.msra.mxu0 %v639
  %726 = vmatpush.msra.mxu0 %v635
  %727 = vmatpush.msra.mxu0 %v631
  %728 = vmatpush.msra.mxu0 %v627
  %729 = vmatpush.msra.mxu0 %v623
  %730 = vmatpush.msra.mxu0 %v619
  %731 = vmatmul.f32.gmra.mxu0 %v653
  %v732 = vpop.f32.mrf.mxu0
  %v733 = vadd.f32 0.0, %v732
  %734 = vdwg.mxu0
  %v735 = vld [vmem:[%s4 + $0x70] sm:$0xff]
  %v736 = vld [vmem:[%s4 + $0x78] sm:$0xff]
  %v737 = vld [vmem:[%s4 + $0x80] sm:$0xff]
  %v738 = vld [vmem:[%s4 + $0x88] sm:$0xff]
  %v739 = vld [vmem:[%s4 + $0x90] sm:$0xff]
  %v740 = vld [vmem:[%s4 + $0x98] sm:$0xff]
  %742 = vset.pattern.permute.xlu0 0
  %743 = vperm.xlu0 %742, %v735
  %v744 = vpop.permute.xlu0 %743
  %747 = vset.pattern.permute.xlu0 0
  %748 = vperm.xlu0 %747, %v736
  %v749 = vpop.permute.xlu0 %748
  %752 = vset.pattern.permute.xlu0 0
  %753 = vperm.xlu0 %752, %v737
  %v754 = vpop.permute.xlu0 %753
  %v756 = vmul.f32 %v354, %v744
  %v757 = vmul.f32 %v355, %v744
  %v758 = vmul.f32 %v356, %v744
  %v759 = vmul.f32 %v357, %v744
  %v760 = vmul.f32 %v358, %v749
  %v761 = vmul.f32 %v359, %v749
  %v762 = vmul.f32 %v360, %v749
  %v763 = vmul.f32 %v361, %v749
  %v764 = vmul.f32 %v673, %v754
  %v765 = vmul.f32 %v693, %v754
  %v766 = vmul.f32 %v713, %v754
  %v767 = vmul.f32 %v733, %v754
  %769 = vset.pattern.permute.xlu0 0
  %770 = vperm.xlu0 %769, %v738
  %v771 = vpop.permute.xlu0 %770
  %774 = vset.pattern.permute.xlu0 0
  %775 = vperm.xlu0 %774, %v739
  %v776 = vpop.permute.xlu0 %775
  %779 = vset.pattern.permute.xlu0 0
  %780 = vperm.xlu0 %779, %v740
  %v781 = vpop.permute.xlu0 %780
  %v783 = vadd.f32 %v756, %v771
  %v784 = vadd.f32 %v757, %v771
  %v785 = vadd.f32 %v758, %v771
  %v786 = vadd.f32 %v759, %v771
  %v787 = vadd.f32 %v760, %v776
  %v788 = vadd.f32 %v761, %v776
  %v789 = vadd.f32 %v762, %v776
  %v790 = vadd.f32 %v763, %v776
  %v791 = vadd.f32 %v764, %v781
  %v792 = vadd.f32 %v765, %v781
  %v793 = vadd.f32 %v766, %v781
  %v794 = vadd.f32 %v767, %v781
  %v795 = vmax.f32 %v783, 0.0
  %v796 = vmax.f32 %v784, 0.0
  %v797 = vmax.f32 %v785, 0.0
  %v798 = vmax.f32 %v786, 0.0
  %v799 = vmax.f32 %v787, 0.0
  %v800 = vmax.f32 %v788, 0.0
  %v801 = vmax.f32 %v789, 0.0
  %v802 = vmax.f32 %v790, 0.0
  %v803 = vmax.f32 %v791, 0.0
  %v804 = vmax.f32 %v792, 0.0
  %v805 = vmax.f32 %v793, 0.0
  %v806 = vmax.f32 %v794, 0.0
  %v807 = vld [vmem:[%s4 + $0xa0] sm:$0xff]
  %vm808 = vcmask 195584
  %v810 = vsel %vm808, %v807, 0
  %812 = vmatpush.msra.mxu0 0.0
  %813 = vmatpush.msra.mxu0 0.0
  %814 = vmatpush.msra.mxu0 0.0
  %815 = vmatpush.msra.mxu0 0.0
  %816 = vmatpush.msra.mxu0 0.0
  %817 = vmatpush.msra.mxu0 0.0
  %818 = vmatpush.msra.mxu0 0.0
  %819 = vmatpush.msra.mxu0 0.0
  %820 = vmatpush.msra.mxu0 0.0
  %821 = vmatpush.msra.mxu0 0.0
  %822 = vmatpush.msra.mxu0 0.0
  %823 = vmatpush.msra.mxu0 0.0
  %824 = vmatpush.msra.mxu0 0.0
  %825 = vmatpush.msra.mxu0 %v803
  %826 = vmatpush.msra.mxu0 %v799
  %827 = vmatpush.msra.mxu0 %v795
  %828 = vmatmul.f32.gmra.mxu0 %v810
  %v829 = vpop.f32.mrf.mxu0
  %v830 = vadd.f32 0.0, %v829
  %831 = vdwg.mxu0
  %832 = vmatpush.msra.mxu0 0.0
  %833 = vmatpush.msra.mxu0 0.0
  %834 = vmatpush.msra.mxu0 0.0
  %835 = vmatpush.msra.mxu0 0.0
  %836 = vmatpush.msra.mxu0 0.0
  %837 = vmatpush.msra.mxu0 0.0
  %838 = vmatpush.msra.mxu0 0.0
  %839 = vmatpush.msra.mxu0 0.0
  %840 = vmatpush.msra.mxu0 0.0
  %841 = vmatpush.msra.mxu0 0.0
  %842 = vmatpush.msra.mxu0 0.0
  %843 = vmatpush.msra.mxu0 0.0
  %844 = vmatpush.msra.mxu0 0.0
  %845 = vmatpush.msra.mxu0 %v804
  %846 = vmatpush.msra.mxu0 %v800
  %847 = vmatpush.msra.mxu0 %v796
  %848 = vmatmul.f32.gmra.mxu0 %v810
  %v849 = vpop.f32.mrf.mxu0
  %v850 = vadd.f32 0.0, %v849
  %851 = vdwg.mxu0
  %852 = vmatpush.msra.mxu0 0.0
  %853 = vmatpush.msra.mxu0 0.0
  %854 = vmatpush.msra.mxu0 0.0
  %855 = vmatpush.msra.mxu0 0.0
  %856 = vmatpush.msra.mxu0 0.0
  %857 = vmatpush.msra.mxu0 0.0
  %858 = vmatpush.msra.mxu0 0.0
  %859 = vmatpush.msra.mxu0 0.0
  %860 = vmatpush.msra.mxu0 0.0
  %861 = vmatpush.msra.mxu0 0.0
  %862 = vmatpush.msra.mxu0 0.0
  %863 = vmatpush.msra.mxu0 0.0
  %864 = vmatpush.msra.mxu0 0.0
  %865 = vmatpush.msra.mxu0 %v805
  %866 = vmatpush.msra.mxu0 %v801
  %867 = vmatpush.msra.mxu0 %v797
  %868 = vmatmul.f32.gmra.mxu0 %v810
  %v869 = vpop.f32.mrf.mxu0
  %v870 = vadd.f32 0.0, %v869
  %871 = vdwg.mxu0
  %872 = vmatpush.msra.mxu0 0.0
  %873 = vmatpush.msra.mxu0 0.0
  %874 = vmatpush.msra.mxu0 0.0
  %875 = vmatpush.msra.mxu0 0.0
  %876 = vmatpush.msra.mxu0 0.0
  %877 = vmatpush.msra.mxu0 0.0
  %878 = vmatpush.msra.mxu0 0.0
  %879 = vmatpush.msra.mxu0 0.0
  %880 = vmatpush.msra.mxu0 0.0
  %881 = vmatpush.msra.mxu0 0.0
  %882 = vmatpush.msra.mxu0 0.0
  %883 = vmatpush.msra.mxu0 0.0
  %884 = vmatpush.msra.mxu0 0.0
  %885 = vmatpush.msra.mxu0 %v806
  %886 = vmatpush.msra.mxu0 %v802
  %887 = vmatpush.msra.mxu0 %v798
  %888 = vmatmul.f32.gmra.mxu0 %v810
  %v889 = vpop.f32.mrf.mxu0
  %v890 = vadd.f32 0.0, %v889
  %891 = vdwg.mxu0
  %v892 = vld [vmem:[%s4 + $0xa8] sm:$0xff]
  %v893 = vld [vmem:[%s4 + $0xb0] sm:$0xff]
  %895 = vset.pattern.permute.xlu0 0
  %896 = vperm.xlu0 %895, %v892
  %v897 = vpop.permute.xlu0 %896
  %v899 = vmul.f32 %v830, %v897
  %v900 = vmul.f32 %v850, %v897
  %v901 = vmul.f32 %v870, %v897
  %v902 = vmul.f32 %v890, %v897
  %904 = vset.pattern.permute.xlu0 0
  %905 = vperm.xlu0 %904, %v893
  %v906 = vpop.permute.xlu0 %905
  %v908 = vadd.f32 %v899, %v906
  %v909 = vadd.f32 %v900, %v906
  %v910 = vadd.f32 %v901, %v906
  %v911 = vadd.f32 %v902, %v906
  %v912 = vmax.f32 %v908, 0.0
  %v913 = vmax.f32 %v909, 0.0
  %v914 = vmax.f32 %v910, 0.0
  %v915 = vmax.f32 %v911, 0.0
  %v916 = vld [vmem:[%s4 + $0xb8] sm:$0xff]
  %917 = vrot.lane.b32.xlu0 %v912, 17
  %v918 = vpop.permute.xlu0 %917
  %919 = vrot.lane.b32.xlu0 %v913, 17
  %v920 = vpop.permute.xlu0 %919
  %921 = vrot.lane.b32.xlu0 %v914, 17
  %v922 = vpop.permute.xlu0 %921
  %923 = vrot.lane.b32.xlu0 %v915, 17
  %v924 = vpop.permute.xlu0 %923
  %v925 = vsel %vm83, %v922, %v924
  %v926 = vsel %vm83, %v920, %v922
  %v927 = vsel %vm83, %v918, %v920
  %v928 = vsel %vm83, %v924, %v918
  %929 = vrot.lane.b32.xlu0 %v912, 16
  %v930 = vpop.permute.xlu0 %929
  %931 = vrot.lane.b32.xlu0 %v913, 16
  %v932 = vpop.permute.xlu0 %931
  %933 = vrot.lane.b32.xlu0 %v914, 16
  %v934 = vpop.permute.xlu0 %933
  %935 = vrot.lane.b32.xlu0 %v915, 16
  %v936 = vpop.permute.xlu0 %935
  %v937 = vsel %vm96, %v934, %v936
  %v938 = vsel %vm96, %v932, %v934
  %v939 = vsel %vm96, %v930, %v932
  %v940 = vsel %vm96, %v936, %v930
  %941 = vrot.lane.b32.xlu0 %v912, 15
  %v942 = vpop.permute.xlu0 %941
  %943 = vrot.lane.b32.xlu0 %v913, 15
  %v944 = vpop.permute.xlu0 %943
  %945 = vrot.lane.b32.xlu0 %v914, 15
  %v946 = vpop.permute.xlu0 %945
  %947 = vrot.lane.b32.xlu0 %v915, 15
  %v948 = vpop.permute.xlu0 %947
  %v949 = vsel %vm109, %v946, %v948
  %v950 = vsel %vm109, %v944, %v946
  %v951 = vsel %vm109, %v942, %v944
  %v952 = vsel %vm109, %v948, %v942
  %953 = vrot.lane.b32.xlu0 %v912, 1
  %v954 = vpop.permute.xlu0 %953
  %955 = vrot.lane.b32.xlu0 %v913, 1
  %v956 = vpop.permute.xlu0 %955
  %957 = vrot.lane.b32.xlu0 %v914, 1
  %v958 = vpop.permute.xlu0 %957
  %959 = vrot.lane.b32.xlu0 %v915, 1
  %v960 = vpop.permute.xlu0 %959
  %v961 = vsel %vm122, %v958, %v960
  %v962 = vsel %vm122, %v956, %v958
  %v963 = vsel %vm122, %v954, %v956
  %v964 = vsel %vm122, %v960, %v954
  %965 = vrot.lane.b32.xlu0 %v912, 127
  %v966 = vpop.permute.xlu0 %965
  %967 = vrot.lane.b32.xlu0 %v913, 127
  %v968 = vpop.permute.xlu0 %967
  %969 = vrot.lane.b32.xlu0 %v914, 127
  %v970 = vpop.permute.xlu0 %969
  %971 = vrot.lane.b32.xlu0 %v915, 127
  %v972 = vpop.permute.xlu0 %971
  %v973 = vsel %vm135, %v970, %v972
  %v974 = vsel %vm135, %v968, %v970
  %v975 = vsel %vm135, %v966, %v968
  %v976 = vsel %vm135, %v972, %v966
  %977 = vrot.lane.b32.xlu0 %v912, 113
  %v978 = vpop.permute.xlu0 %977
  %979 = vrot.lane.b32.xlu0 %v913, 113
  %v980 = vpop.permute.xlu0 %979
  %981 = vrot.lane.b32.xlu0 %v914, 113
  %v982 = vpop.permute.xlu0 %981
  %983 = vrot.lane.b32.xlu0 %v915, 113
  %v984 = vpop.permute.xlu0 %983
  %v985 = vsel %vm148, %v982, %v984
  %v986 = vsel %vm148, %v980, %v982
  %v987 = vsel %vm148, %v978, %v980
  %v988 = vsel %vm148, %v984, %v978
  %989 = vrot.lane.b32.xlu0 %v912, 112
  %v990 = vpop.permute.xlu0 %989
  %991 = vrot.lane.b32.xlu0 %v913, 112
  %v992 = vpop.permute.xlu0 %991
  %993 = vrot.lane.b32.xlu0 %v914, 112
  %v994 = vpop.permute.xlu0 %993
  %995 = vrot.lane.b32.xlu0 %v915, 112
  %v996 = vpop.permute.xlu0 %995
  %v997 = vsel %vm161, %v994, %v996
  %v998 = vsel %vm161, %v992, %v994
  %v999 = vsel %vm161, %v990, %v992
  %v1000 = vsel %vm161, %v996, %v990
  %1001 = vrot.lane.b32.xlu0 %v912, 111
  %v1002 = vpop.permute.xlu0 %1001
  %1003 = vrot.lane.b32.xlu0 %v913, 111
  %v1004 = vpop.permute.xlu0 %1003
  %1005 = vrot.lane.b32.xlu0 %v914, 111
  %v1006 = vpop.permute.xlu0 %1005
  %1007 = vrot.lane.b32.xlu0 %v915, 111
  %v1008 = vpop.permute.xlu0 %1007
  %v1009 = vsel %vm174, %v1006, %v1008
  %v1010 = vsel %vm174, %v1004, %v1006
  %v1011 = vsel %vm174, %v1002, %v1004
  %v1012 = vsel %vm174, %v1008, %v1002
  %v1013 = vmul.f32 %v928, %v26
  %v1014 = vmul.f32 %v927, %v27
  %v1015 = vmul.f32 %v926, %v28
  %v1016 = vmul.f32 %v925, %v29
  %v1017 = vmul.f32 %v940, %v30
  %v1018 = vmul.f32 %v939, %v31
  %v1019 = vmul.f32 %v938, %v32
  %v1020 = vmul.f32 %v937, %v33
  %v1021 = vmul.f32 %v952, %v34
  %v1022 = vmul.f32 %v951, %v35
  %v1023 = vmul.f32 %v950, %v36
  %v1024 = vmul.f32 %v949, %v37
  %v1025 = vmul.f32 %v964, %v38
  %v1026 = vmul.f32 %v963, %v39
  %v1027 = vmul.f32 %v962, %v40
  %v1028 = vmul.f32 %v961, %v41
  %v1029 = vmul.f32 %v912, %v42
  %v1030 = vmul.f32 %v913, %v43
  %v1031 = vmul.f32 %v914, %v44
  %v1032 = vmul.f32 %v915, %v45
  %v1033 = vmul.f32 %v975, %v46
  %v1034 = vmul.f32 %v974, %v47
  %v1035 = vmul.f32 %v973, %v48
  %v1036 = vmul.f32 %v976, %v49
  %v1037 = vmul.f32 %v987, %v50
  %v1038 = vmul.f32 %v986, %v51
  %v1039 = vmul.f32 %v985, %v52
  %v1040 = vmul.f32 %v988, %v53
  %v1041 = vmul.f32 %v999, %v54
  %v1042 = vmul.f32 %v998, %v55
  %v1043 = vmul.f32 %v997, %v56
  %v1044 = vmul.f32 %v1000, %v57
  %v1045 = vmul.f32 %v1011, %v58
  %v1046 = vmul.f32 %v1010, %v59
  %v1047 = vmul.f32 %v1009, %v60
  %v1048 = vmul.f32 %v1012, %v61
  %v1050 = vsel %vm215, %v916, 0
  %1052 = vmatpush.msra.mxu0 0.0
  %1053 = vmatpush.msra.mxu0 0.0
  %1054 = vmatpush.msra.mxu0 0.0
  %1055 = vmatpush.msra.mxu0 0.0
  %1056 = vmatpush.msra.mxu0 0.0
  %1057 = vmatpush.msra.mxu0 0.0
  %1058 = vmatpush.msra.mxu0 0.0
  %1059 = vmatpush.msra.mxu0 %v1045
  %1060 = vmatpush.msra.mxu0 %v1041
  %1061 = vmatpush.msra.mxu0 %v1037
  %1062 = vmatpush.msra.mxu0 %v1033
  %1063 = vmatpush.msra.mxu0 %v1029
  %1064 = vmatpush.msra.mxu0 %v1025
  %1065 = vmatpush.msra.mxu0 %v1021
  %1066 = vmatpush.msra.mxu0 %v1017
  %1067 = vmatpush.msra.mxu0 %v1013
  %1068 = vmatmul.f32.gmra.mxu0 %v1050
  %v1069 = vpop.f32.mrf.mxu0
  %v1070 = vadd.f32 0.0, %v1069
  %1071 = vdwg.mxu0
  %1072 = vmatpush.msra.mxu0 0.0
  %1073 = vmatpush.msra.mxu0 0.0
  %1074 = vmatpush.msra.mxu0 0.0
  %1075 = vmatpush.msra.mxu0 0.0
  %1076 = vmatpush.msra.mxu0 0.0
  %1077 = vmatpush.msra.mxu0 0.0
  %1078 = vmatpush.msra.mxu0 0.0
  %1079 = vmatpush.msra.mxu0 %v1046
  %1080 = vmatpush.msra.mxu0 %v1042
  %1081 = vmatpush.msra.mxu0 %v1038
  %1082 = vmatpush.msra.mxu0 %v1034
  %1083 = vmatpush.msra.mxu0 %v1030
  %1084 = vmatpush.msra.mxu0 %v1026
  %1085 = vmatpush.msra.mxu0 %v1022
  %1086 = vmatpush.msra.mxu0 %v1018
  %1087 = vmatpush.msra.mxu0 %v1014
  %1088 = vmatmul.f32.gmra.mxu0 %v1050
  %v1089 = vpop.f32.mrf.mxu0
  %v1090 = vadd.f32 0.0, %v1089
  %1091 = vdwg.mxu0
  %1092 = vmatpush.msra.mxu0 0.0
  %1093 = vmatpush.msra.mxu0 0.0
  %1094 = vmatpush.msra.mxu0 0.0
  %1095 = vmatpush.msra.mxu0 0.0
  %1096 = vmatpush.msra.mxu0 0.0
  %1097 = vmatpush.msra.mxu0 0.0
  %1098 = vmatpush.msra.mxu0 0.0
  %1099 = vmatpush.msra.mxu0 %v1047
  %1100 = vmatpush.msra.mxu0 %v1043
  %1101 = vmatpush.msra.mxu0 %v1039
  %1102 = vmatpush.msra.mxu0 %v1035
  %1103 = vmatpush.msra.mxu0 %v1031
  %1104 = vmatpush.msra.mxu0 %v1027
  %1105 = vmatpush.msra.mxu0 %v1023
  %1106 = vmatpush.msra.mxu0 %v1019
  %1107 = vmatpush.msra.mxu0 %v1015
  %1108 = vmatmul.f32.gmra.mxu0 %v1050
  %v1109 = vpop.f32.mrf.mxu0
  %v1110 = vadd.f32 0.0, %v1109
  %1111 = vdwg.mxu0
  %1112 = vmatpush.msra.mxu0 0.0
  %1113 = vmatpush.msra.mxu0 0.0
  %1114 = vmatpush.msra.mxu0 0.0
  %1115 = vmatpush.msra.mxu0 0.0
  %1116 = vmatpush.msra.mxu0 0.0
  %1117 = vmatpush.msra.mxu0 0.0
  %1118 = vmatpush.msra.mxu0 0.0
  %1119 = vmatpush.msra.mxu0 %v1048
  %1120 = vmatpush.msra.mxu0 %v1044
  %1121 = vmatpush.msra.mxu0 %v1040
  %1122 = vmatpush.msra.mxu0 %v1036
  %1123 = vmatpush.msra.mxu0 %v1032
  %1124 = vmatpush.msra.mxu0 %v1028
  %1125 = vmatpush.msra.mxu0 %v1024
  %1126 = vmatpush.msra.mxu0 %v1020
  %1127 = vmatpush.msra.mxu0 %v1016
  %1128 = vmatmul.f32.gmra.mxu0 %v1050
  %v1129 = vpop.f32.mrf.mxu0
  %v1130 = vadd.f32 0.0, %v1129
  %1131 = vdwg.mxu0
  %1132 = vst [vmem:[%s5] sm:$0xff] %v354
  %1133 = vst [vmem:[%s5 + $0x8] sm:$0xff] %v355
  %1134 = vst [vmem:[%s5 + $0x10] sm:$0xff] %v356
  %1135 = vst [vmem:[%s5 + $0x18] sm:$0xff] %v357
  %1136 = vst [vmem:[%s5 + $0x20] sm:$0xff] %v358
  %1137 = vst [vmem:[%s5 + $0x28] sm:$0xff] %v359
  %1138 = vst [vmem:[%s5 + $0x30] sm:$0xff] %v360
  %1139 = vst [vmem:[%s5 + $0x38] sm:$0xff] %v361
  %1140 = vst [vmem:[%s5 + $0x40] sm:$0xff] %v673
  %1141 = vst [vmem:[%s5 + $0x48] sm:$0xff] %v693
  %1142 = vst [vmem:[%s5 + $0x50] sm:$0xff] %v713
  %1143 = vst [vmem:[%s5 + $0x58] sm:$0xff] %v733
  %1144 = vst [vmem:[%s5 + $0x60] sm:$0xff] %v1070
  %1145 = vst [vmem:[%s5 + $0x68] sm:$0xff] %v1090
  %1146 = vst [vmem:[%s5 + $0x70] sm:$0xff] %v1110
  %1147 = vst [vmem:[%s5 + $0x78] sm:$0xff] %v1130
  %v1148 = vld [vmem:[%s4 + $0x150] sm:$0xff]
  %v1149 = vld [vmem:[%s4 + $0x158] sm:$0xff]
  %v1150 = vld [vmem:[%s4 + $0x160] sm:$0xff]
  %v1151 = vld [vmem:[%s4 + $0x168] sm:$0xff]
  %v1152 = vld [vmem:[%s4 + $0x170] sm:$0xff]
  %v1153 = vld [vmem:[%s4 + $0x178] sm:$0xff]
  %v1154 = vld [vmem:[%s4 + $0x180] sm:$0xff]
  %v1155 = vld [vmem:[%s4 + $0x188] sm:$0xff]
  %1157 = vset.pattern.permute.xlu0 0
  %1158 = vperm.xlu0 %1157, %v1148
  %v1159 = vpop.permute.xlu0 %1158
  %1162 = vset.pattern.permute.xlu0 0
  %1163 = vperm.xlu0 %1162, %v1149
  %v1164 = vpop.permute.xlu0 %1163
  %1167 = vset.pattern.permute.xlu0 0
  %1168 = vperm.xlu0 %1167, %v1150
  %v1169 = vpop.permute.xlu0 %1168
  %1172 = vset.pattern.permute.xlu0 0
  %1173 = vperm.xlu0 %1172, %v1151
  %v1174 = vpop.permute.xlu0 %1173
  %v1176 = vmul.f32 %v354, %v1159
  %v1177 = vmul.f32 %v355, %v1159
  %v1178 = vmul.f32 %v356, %v1159
  %v1179 = vmul.f32 %v357, %v1159
  %v1180 = vmul.f32 %v358, %v1164
  %v1181 = vmul.f32 %v359, %v1164
  %v1182 = vmul.f32 %v360, %v1164
  %v1183 = vmul.f32 %v361, %v1164
  %v1184 = vmul.f32 %v673, %v1169
  %v1185 = vmul.f32 %v693, %v1169
  %v1186 = vmul.f32 %v713, %v1169
  %v1187 = vmul.f32 %v733, %v1169
  %v1188 = vmul.f32 %v1070, %v1174
  %v1189 = vmul.f32 %v1090, %v1174
  %v1190 = vmul.f32 %v1110, %v1174
  %v1191 = vmul.f32 %v1130, %v1174
  %1193 = vset.pattern.permute.xlu0 0
  %1194 = vperm.xlu0 %1193, %v1152
  %v1195 = vpop.permute.xlu0 %1194
  %1198 = vset.pattern.permute.xlu0 0
  %1199 = vperm.xlu0 %1198, %v1153
  %v1200 = vpop.permute.xlu0 %1199
  %1203 = vset.pattern.permute.xlu0 0
  %1204 = vperm.xlu0 %1203, %v1154
  %v1205 = vpop.permute.xlu0 %1204
  %1208 = vset.pattern.permute.xlu0 0
  %1209 = vperm.xlu0 %1208, %v1155
  %v1210 = vpop.permute.xlu0 %1209
  %v1212 = vadd.f32 %v1176, %v1195
  %v1213 = vadd.f32 %v1177, %v1195
  %v1214 = vadd.f32 %v1178, %v1195
  %v1215 = vadd.f32 %v1179, %v1195
  %v1216 = vadd.f32 %v1180, %v1200
  %v1217 = vadd.f32 %v1181, %v1200
  %v1218 = vadd.f32 %v1182, %v1200
  %v1219 = vadd.f32 %v1183, %v1200
  %v1220 = vadd.f32 %v1184, %v1205
  %v1221 = vadd.f32 %v1185, %v1205
  %v1222 = vadd.f32 %v1186, %v1205
  %v1223 = vadd.f32 %v1187, %v1205
  %v1224 = vadd.f32 %v1188, %v1210
  %v1225 = vadd.f32 %v1189, %v1210
  %v1226 = vadd.f32 %v1190, %v1210
  %v1227 = vadd.f32 %v1191, %v1210
  %v1228 = vmax.f32 %v1212, 0.0
  %v1229 = vmax.f32 %v1213, 0.0
  %v1230 = vmax.f32 %v1214, 0.0
  %v1231 = vmax.f32 %v1215, 0.0
  %v1232 = vmax.f32 %v1216, 0.0
  %v1233 = vmax.f32 %v1217, 0.0
  %v1234 = vmax.f32 %v1218, 0.0
  %v1235 = vmax.f32 %v1219, 0.0
  %v1236 = vmax.f32 %v1220, 0.0
  %v1237 = vmax.f32 %v1221, 0.0
  %v1238 = vmax.f32 %v1222, 0.0
  %v1239 = vmax.f32 %v1223, 0.0
  %v1240 = vmax.f32 %v1224, 0.0
  %v1241 = vmax.f32 %v1225, 0.0
  %v1242 = vmax.f32 %v1226, 0.0
  %v1243 = vmax.f32 %v1227, 0.0
  %v1244 = vld [vmem:[%s4 + $0x190] sm:$0xff]
  %v1245 = vld [vmem:[%s4 + $0x198] sm:$0xff]
  %vm1246 = vcmask 261120
  %v1248 = vsel %vm1246, %v1244, 0
  %v1251 = vsel %vm1246, %v1245, 0
  %1253 = vmatpush.msra.mxu0 0.0
  %1254 = vmatpush.msra.mxu0 0.0
  %1255 = vmatpush.msra.mxu0 0.0
  %1256 = vmatpush.msra.mxu0 0.0
  %1257 = vmatpush.msra.mxu0 0.0
  %1258 = vmatpush.msra.mxu0 0.0
  %1259 = vmatpush.msra.mxu0 0.0
  %1260 = vmatpush.msra.mxu0 0.0
  %1261 = vmatpush.msra.mxu0 0.0
  %1262 = vmatpush.msra.mxu0 0.0
  %1263 = vmatpush.msra.mxu0 0.0
  %1264 = vmatpush.msra.mxu0 0.0
  %1265 = vmatpush.msra.mxu0 %v1240
  %1266 = vmatpush.msra.mxu0 %v1236
  %1267 = vmatpush.msra.mxu0 %v1232
  %1268 = vmatpush.msra.mxu0 %v1228
  %1269 = vmatmul.f32.gmra.mxu0 %v1248
  %v1270 = vpop.f32.mrf.mxu0
  %v1271 = vadd.f32 0.0, %v1270
  %1272 = vmatmul.f32.gmra.mxu0 %v1251
  %v1273 = vpop.f32.mrf.mxu0
  %v1274 = vadd.f32 0.0, %v1273
  %1275 = vdwg.mxu0
  %1276 = vmatpush.msra.mxu0 0.0
  %1277 = vmatpush.msra.mxu0 0.0
  %1278 = vmatpush.msra.mxu0 0.0
  %1279 = vmatpush.msra.mxu0 0.0
  %1280 = vmatpush.msra.mxu0 0.0
  %1281 = vmatpush.msra.mxu0 0.0
  %1282 = vmatpush.msra.mxu0 0.0
  %1283 = vmatpush.msra.mxu0 0.0
  %1284 = vmatpush.msra.mxu0 0.0
  %1285 = vmatpush.msra.mxu0 0.0
  %1286 = vmatpush.msra.mxu0 0.0
  %1287 = vmatpush.msra.mxu0 0.0
  %1288 = vmatpush.msra.mxu0 %v1241
  %1289 = vmatpush.msra.mxu0 %v1237
  %1290 = vmatpush.msra.mxu0 %v1233
  %1291 = vmatpush.msra.mxu0 %v1229
  %1292 = vmatmul.f32.gmra.mxu0 %v1248
  %v1293 = vpop.f32.mrf.mxu0
  %v1294 = vadd.f32 0.0, %v1293
  %1295 = vmatmul.f32.gmra.mxu0 %v1251
  %v1296 = vpop.f32.mrf.mxu0
  %v1297 = vadd.f32 0.0, %v1296
  %1298 = vdwg.mxu0
  %1299 = vmatpush.msra.mxu0 0.0
  %1300 = vmatpush.msra.mxu0 0.0
  %1301 = vmatpush.msra.mxu0 0.0
  %1302 = vmatpush.msra.mxu0 0.0
  %1303 = vmatpush.msra.mxu0 0.0
  %1304 = vmatpush.msra.mxu0 0.0
  %1305 = vmatpush.msra.mxu0 0.0
  %1306 = vmatpush.msra.mxu0 0.0
  %1307 = vmatpush.msra.mxu0 0.0
  %1308 = vmatpush.msra.mxu0 0.0
  %1309 = vmatpush.msra.mxu0 0.0
  %1310 = vmatpush.msra.mxu0 0.0
  %1311 = vmatpush.msra.mxu0 %v1242
  %1312 = vmatpush.msra.mxu0 %v1238
  %1313 = vmatpush.msra.mxu0 %v1234
  %1314 = vmatpush.msra.mxu0 %v1230
  %1315 = vmatmul.f32.gmra.mxu0 %v1248
  %v1316 = vpop.f32.mrf.mxu0
  %v1317 = vadd.f32 0.0, %v1316
  %1318 = vmatmul.f32.gmra.mxu0 %v1251
  %v1319 = vpop.f32.mrf.mxu0
  %v1320 = vadd.f32 0.0, %v1319
  %1321 = vdwg.mxu0
  %1322 = vmatpush.msra.mxu0 0.0
  %1323 = vmatpush.msra.mxu0 0.0
  %1324 = vmatpush.msra.mxu0 0.0
  %1325 = vmatpush.msra.mxu0 0.0
  %1326 = vmatpush.msra.mxu0 0.0
  %1327 = vmatpush.msra.mxu0 0.0
  %1328 = vmatpush.msra.mxu0 0.0
  %1329 = vmatpush.msra.mxu0 0.0
  %1330 = vmatpush.msra.mxu0 0.0
  %1331 = vmatpush.msra.mxu0 0.0
  %1332 = vmatpush.msra.mxu0 0.0
  %1333 = vmatpush.msra.mxu0 0.0
  %1334 = vmatpush.msra.mxu0 %v1243
  %1335 = vmatpush.msra.mxu0 %v1239
  %1336 = vmatpush.msra.mxu0 %v1235
  %1337 = vmatpush.msra.mxu0 %v1231
  %1338 = vmatmul.f32.gmra.mxu0 %v1248
  %v1339 = vpop.f32.mrf.mxu0
  %v1340 = vadd.f32 0.0, %v1339
  %1341 = vmatmul.f32.gmra.mxu0 %v1251
  %v1342 = vpop.f32.mrf.mxu0
  %v1343 = vadd.f32 0.0, %v1342
  %1344 = vdwg.mxu0
  %v1345 = vpack.c.bf16 %v1274, %v1271
  %v1346 = vpack.c.bf16 %v1297, %v1294
  %v1347 = vpack.c.bf16 %v1320, %v1317
  %v1348 = vpack.c.bf16 %v1343, %v1340
  %v1349 = vld [vmem:[%s3] sm:$0xf]
  %v1350 = vld [vmem:[%s3 + $0x4] sm:$0xf]
  %v1351 = vld [vmem:[%s3 + $0x8] sm:$0xf]
  %v1352 = vld [vmem:[%s3 + $0xc] sm:$0xf]
  %v1353 = vld [vmem:[%s3 + $0x10] sm:$0xf]
  %v1354 = vld [vmem:[%s3 + $0x14] sm:$0xf]
  %v1355 = vld [vmem:[%s3 + $0x18] sm:$0xf]
  %v1356 = vld [vmem:[%s3 + $0x1c] sm:$0xf]
  %v1357 = vld [vmem:[%s3 + $0x20] sm:$0xf]
  %v1358 = vld [vmem:[%s3 + $0x24] sm:$0xf]
  %v1359 = vld [vmem:[%s3 + $0x28] sm:$0xf]
  %v1360 = vld [vmem:[%s3 + $0x2c] sm:$0xf]
  %v1361 = vld [vmem:[%s3 + $0x30] sm:$0xf]
  %v1362 = vld [vmem:[%s3 + $0x34] sm:$0xf]
  %v1363 = vld [vmem:[%s3 + $0x38] sm:$0xf]
  %v1364 = vld [vmem:[%s3 + $0x3c] sm:$0xf]
  %v1365 = vld [vmem:[%s3 + $0x40] sm:$0xf]
  %v1366 = vld [vmem:[%s3 + $0x44] sm:$0xf]
  %v1367 = vld [vmem:[%s3 + $0x48] sm:$0xf]
  %v1368 = vld [vmem:[%s3 + $0x4c] sm:$0xf]
  %v1369 = vld [vmem:[%s3 + $0x50] sm:$0xf]
  %v1370 = vld [vmem:[%s3 + $0x54] sm:$0xf]
  %v1371 = vld [vmem:[%s3 + $0x58] sm:$0xf]
  %v1372 = vld [vmem:[%s3 + $0x5c] sm:$0xf]
  %v1373 = vld [vmem:[%s3 + $0x60] sm:$0xf]
  %v1374 = vld [vmem:[%s3 + $0x64] sm:$0xf]
  %v1375 = vld [vmem:[%s3 + $0x68] sm:$0xf]
  %v1376 = vld [vmem:[%s3 + $0x6c] sm:$0xf]
  %v1377 = vld [vmem:[%s3 + $0x70] sm:$0xf]
  %v1378 = vld [vmem:[%s3 + $0x74] sm:$0xf]
  %v1379 = vld [vmem:[%s3 + $0x78] sm:$0xf]
  %v1380 = vld [vmem:[%s3 + $0x7c] sm:$0xf]
  %v1381 = vld [vmem:[%s3 + $0x80] sm:$0xf]
  %v1382 = vld [vmem:[%s3 + $0x84] sm:$0xf]
  %v1383 = vld [vmem:[%s3 + $0x88] sm:$0xf]
  %v1384 = vld [vmem:[%s3 + $0x8c] sm:$0xf]
  %v1385 = vld [vmem:[%s3 + $0x90] sm:$0xf]
  %v1386 = vld [vmem:[%s3 + $0x94] sm:$0xf]
  %v1387 = vld [vmem:[%s3 + $0x98] sm:$0xf]
  %v1388 = vld [vmem:[%s3 + $0x9c] sm:$0xf]
  %v1389 = vld [vmem:[%s3 + $0xa0] sm:$0xf]
  %v1390 = vld [vmem:[%s3 + $0xa4] sm:$0xf]
  %v1391 = vld [vmem:[%s3 + $0xa8] sm:$0xf]
  %v1392 = vld [vmem:[%s3 + $0xac] sm:$0xf]
  %v1393 = vld [vmem:[%s3 + $0xb0] sm:$0xf]
  %v1394 = vld [vmem:[%s3 + $0xb4] sm:$0xf]
  %v1395 = vld [vmem:[%s3 + $0xb8] sm:$0xf]
  %v1396 = vld [vmem:[%s3 + $0xbc] sm:$0xf]
  %v1397 = vld [vmem:[%s3 + $0xc0] sm:$0xf]
  %v1398 = vld [vmem:[%s3 + $0xc4] sm:$0xf]
  %v1399 = vld [vmem:[%s3 + $0xc8] sm:$0xf]
  %v1400 = vld [vmem:[%s3 + $0xcc] sm:$0xf]
  %v1401 = vld [vmem:[%s3 + $0xd0] sm:$0xf]
  %v1402 = vld [vmem:[%s3 + $0xd4] sm:$0xf]
  %v1403 = vld [vmem:[%s3 + $0xd8] sm:$0xf]
  %v1404 = vld [vmem:[%s3 + $0xdc] sm:$0xf]
  %v1405 = vld [vmem:[%s3 + $0xe0] sm:$0xf]
  %v1406 = vld [vmem:[%s3 + $0xe4] sm:$0xf]
  %v1407 = vld [vmem:[%s3 + $0xe8] sm:$0xf]
  %v1408 = vld [vmem:[%s3 + $0xec] sm:$0xf]
  %v1409 = vld [vmem:[%s3 + $0xf0] sm:$0xf]
  %v1410 = vld [vmem:[%s3 + $0xf4] sm:$0xf]
  %v1411 = vld [vmem:[%s3 + $0xf8] sm:$0xf]
  %v1412 = vld [vmem:[%s3 + $0xfc] sm:$0xf]
  %v1477 = vunpack.c.l.b16 %v1349
  %v1478 = vunpack.c.l.b16 %v1350
  %v1479 = vunpack.c.l.b16 %v1351
  %v1480 = vunpack.c.l.b16 %v1352
  %v1481 = vunpack.c.l.b16 %v1353
  %v1482 = vunpack.c.l.b16 %v1354
  %v1483 = vunpack.c.l.b16 %v1355
  %v1484 = vunpack.c.l.b16 %v1356
  %v1485 = vunpack.c.l.b16 %v1357
  %v1486 = vunpack.c.l.b16 %v1358
  %v1487 = vunpack.c.l.b16 %v1359
  %v1488 = vunpack.c.l.b16 %v1360
  %v1489 = vunpack.c.l.b16 %v1361
  %v1490 = vunpack.c.l.b16 %v1362
  %v1491 = vunpack.c.l.b16 %v1363
  %v1492 = vunpack.c.l.b16 %v1364
  %v1493 = vunpack.c.l.b16 %v1365
  %v1494 = vunpack.c.l.b16 %v1366
  %v1495 = vunpack.c.l.b16 %v1367
  %v1496 = vunpack.c.l.b16 %v1368
  %v1497 = vunpack.c.l.b16 %v1369
  %v1498 = vunpack.c.l.b16 %v1370
  %v1499 = vunpack.c.l.b16 %v1371
  %v1500 = vunpack.c.l.b16 %v1372
  %v1501 = vunpack.c.l.b16 %v1373
  %v1502 = vunpack.c.l.b16 %v1374
  %v1503 = vunpack.c.l.b16 %v1375
  %v1504 = vunpack.c.l.b16 %v1376
  %v1505 = vunpack.c.l.b16 %v1377
  %v1506 = vunpack.c.l.b16 %v1378
  %v1507 = vunpack.c.l.b16 %v1379
  %v1508 = vunpack.c.l.b16 %v1380
  %v1509 = vunpack.c.l.b16 %v1381
  %v1510 = vunpack.c.l.b16 %v1382
  %v1511 = vunpack.c.l.b16 %v1383
  %v1512 = vunpack.c.l.b16 %v1384
  %v1513 = vunpack.c.l.b16 %v1385
  %v1514 = vunpack.c.l.b16 %v1386
  %v1515 = vunpack.c.l.b16 %v1387
  %v1516 = vunpack.c.l.b16 %v1388
  %v1517 = vunpack.c.l.b16 %v1389
  %v1518 = vunpack.c.l.b16 %v1390
  %v1519 = vunpack.c.l.b16 %v1391
  %v1520 = vunpack.c.l.b16 %v1392
  %v1521 = vunpack.c.l.b16 %v1393
  %v1522 = vunpack.c.l.b16 %v1394
  %v1523 = vunpack.c.l.b16 %v1395
  %v1524 = vunpack.c.l.b16 %v1396
  %v1525 = vunpack.c.l.b16 %v1397
  %v1526 = vunpack.c.l.b16 %v1398
  %v1527 = vunpack.c.l.b16 %v1399
  %v1528 = vunpack.c.l.b16 %v1400
  %v1529 = vunpack.c.l.b16 %v1401
  %v1530 = vunpack.c.l.b16 %v1402
  %v1531 = vunpack.c.l.b16 %v1403
  %v1532 = vunpack.c.l.b16 %v1404
  %v1533 = vunpack.c.l.b16 %v1405
  %v1534 = vunpack.c.l.b16 %v1406
  %v1535 = vunpack.c.l.b16 %v1407
  %v1536 = vunpack.c.l.b16 %v1408
  %v1537 = vunpack.c.l.b16 %v1409
  %v1538 = vunpack.c.l.b16 %v1410
  %v1539 = vunpack.c.l.b16 %v1411
  %v1540 = vunpack.c.l.b16 %v1412
  %v1541 = vpack.c.b16 %v1478, %v1477
  %v1542 = vpack.c.b16 %v1480, %v1479
  %v1543 = vpack.c.b16 %v1482, %v1481
  %v1544 = vpack.c.b16 %v1484, %v1483
  %v1545 = vpack.c.b16 %v1486, %v1485
  %v1546 = vpack.c.b16 %v1488, %v1487
  %v1547 = vpack.c.b16 %v1490, %v1489
  %v1548 = vpack.c.b16 %v1492, %v1491
  %v1549 = vpack.c.b16 %v1494, %v1493
  %v1550 = vpack.c.b16 %v1496, %v1495
  %v1551 = vpack.c.b16 %v1498, %v1497
  %v1552 = vpack.c.b16 %v1500, %v1499
  %v1553 = vpack.c.b16 %v1502, %v1501
  %v1554 = vpack.c.b16 %v1504, %v1503
  %v1555 = vpack.c.b16 %v1506, %v1505
  %v1556 = vpack.c.b16 %v1508, %v1507
  %v1557 = vpack.c.b16 %v1510, %v1509
  %v1558 = vpack.c.b16 %v1512, %v1511
  %v1559 = vpack.c.b16 %v1514, %v1513
  %v1560 = vpack.c.b16 %v1516, %v1515
  %v1561 = vpack.c.b16 %v1518, %v1517
  %v1562 = vpack.c.b16 %v1520, %v1519
  %v1563 = vpack.c.b16 %v1522, %v1521
  %v1564 = vpack.c.b16 %v1524, %v1523
  %v1565 = vpack.c.b16 %v1526, %v1525
  %v1566 = vpack.c.b16 %v1528, %v1527
  %v1567 = vpack.c.b16 %v1530, %v1529
  %v1568 = vpack.c.b16 %v1532, %v1531
  %v1569 = vpack.c.b16 %v1534, %v1533
  %v1570 = vpack.c.b16 %v1536, %v1535
  %v1571 = vpack.c.b16 %v1538, %v1537
  %v1572 = vpack.c.b16 %v1540, %v1539
  %1605 = vmatpush.bf16.msra.mxu0 %v1548
  %1606 = vmatpush.bf16.msra.mxu0 %v1547
  %1607 = vmatpush.bf16.msra.mxu0 %v1546
  %1608 = vmatpush.bf16.msra.mxu0 %v1545
  %1609 = vmatpush.bf16.msra.mxu0 %v1544
  %1610 = vmatpush.bf16.msra.mxu0 %v1543
  %1611 = vmatpush.bf16.msra.mxu0 %v1542
  %1612 = vmatpush.bf16.msra.mxu0 %v1541
  %1613 = vmatmul.bf16.gmra.mxu0 %v1345
  %v1614 = vpop.f32.mrf.mxu0
  %v1615 = vadd.f32 0.0, %v1614
  %v1616 = vpop.f32.mrf.mxu0
  %v1617 = vadd.f32 0.0, %v1616
  %1618 = vdwg.mxu0
  %1619 = vmatpush.bf16.msra.mxu0 %v1556
  %1620 = vmatpush.bf16.msra.mxu0 %v1555
  %1621 = vmatpush.bf16.msra.mxu0 %v1554
  %1622 = vmatpush.bf16.msra.mxu0 %v1553
  %1623 = vmatpush.bf16.msra.mxu0 %v1552
  %1624 = vmatpush.bf16.msra.mxu0 %v1551
  %1625 = vmatpush.bf16.msra.mxu0 %v1550
  %1626 = vmatpush.bf16.msra.mxu0 %v1549
  %1627 = vmatmul.bf16.gmra.mxu0 %v1346
  %v1628 = vpop.f32.mrf.mxu0
  %v1629 = vadd.f32 %v1615, %v1628
  %v1630 = vpop.f32.mrf.mxu0
  %v1631 = vadd.f32 %v1617, %v1630
  %1632 = vdwg.mxu0
  %1633 = vmatpush.bf16.msra.mxu0 %v1564
  %1634 = vmatpush.bf16.msra.mxu0 %v1563
  %1635 = vmatpush.bf16.msra.mxu0 %v1562
  %1636 = vmatpush.bf16.msra.mxu0 %v1561
  %1637 = vmatpush.bf16.msra.mxu0 %v1560
  %1638 = vmatpush.bf16.msra.mxu0 %v1559
  %1639 = vmatpush.bf16.msra.mxu0 %v1558
  %1640 = vmatpush.bf16.msra.mxu0 %v1557
  %1641 = vmatmul.bf16.gmra.mxu0 %v1347
  %v1642 = vpop.f32.mrf.mxu0
  %v1643 = vadd.f32 %v1629, %v1642
  %v1644 = vpop.f32.mrf.mxu0
  %v1645 = vadd.f32 %v1631, %v1644
  %1646 = vdwg.mxu0
  %1647 = vmatpush.bf16.msra.mxu0 %v1572
  %1648 = vmatpush.bf16.msra.mxu0 %v1571
  %1649 = vmatpush.bf16.msra.mxu0 %v1570
  %1650 = vmatpush.bf16.msra.mxu0 %v1569
  %1651 = vmatpush.bf16.msra.mxu0 %v1568
  %1652 = vmatpush.bf16.msra.mxu0 %v1567
  %1653 = vmatpush.bf16.msra.mxu0 %v1566
  %1654 = vmatpush.bf16.msra.mxu0 %v1565
  %1655 = vmatmul.bf16.gmra.mxu0 %v1348
  %v1656 = vpop.f32.mrf.mxu0
  %v1657 = vadd.f32 %v1643, %v1656
  %v1658 = vpop.f32.mrf.mxu0
  %v1659 = vadd.f32 %v1645, %v1658
  %1660 = vdwg.mxu0
  %v1661 = vld [vmem:[%s4 + $0xc0] sm:$0xff]
  %v1662 = vld [vmem:[%s4 + $0xc8] sm:$0xff]
  %v1663 = vld [vmem:[%s4 + $0xd0] sm:$0xff]
  %v1664 = vld [vmem:[%s4 + $0xd8] sm:$0xff]
  %1666 = vset.pattern.permute.xlu0 0
  %1667 = vperm.xlu0 %1666, %v1661
  %v1668 = vpop.permute.xlu0 %1667
  %1671 = vset.pattern.permute.xlu0 0
  %1672 = vperm.xlu0 %1671, %v1662
  %v1673 = vpop.permute.xlu0 %1672
  %v1675 = vmul.f32 %v1657, %v1668
  %v1676 = vmul.f32 %v1659, %v1673
  %1678 = vset.pattern.permute.xlu0 0
  %1679 = vperm.xlu0 %1678, %v1663
  %v1680 = vpop.permute.xlu0 %1679
  %1683 = vset.pattern.permute.xlu0 0
  %1684 = vperm.xlu0 %1683, %v1664
  %v1685 = vpop.permute.xlu0 %1684
  %v1687 = vadd.f32 %v1675, %v1680
  %v1688 = vadd.f32 %v1676, %v1685
  %v1689 = vmax.f32 %v1687, 0.0
  %v1690 = vmax.f32 %v1688, 0.0
  %v1691 = vld [vmem:[%s4 + $0xe0] sm:$0xff]
  %v1693 = vsel %vm411, %v1691, 0
  %1695 = vmatpush.msra.mxu0 0.0
  %1696 = vmatpush.msra.mxu0 0.0
  %1697 = vmatpush.msra.mxu0 0.0
  %1698 = vmatpush.msra.mxu0 0.0
  %1699 = vmatpush.msra.mxu0 0.0
  %1700 = vmatpush.msra.mxu0 0.0
  %1701 = vmatpush.msra.mxu0 0.0
  %1702 = vmatpush.msra.mxu0 0.0
  %1703 = vmatpush.msra.mxu0 0.0
  %1704 = vmatpush.msra.mxu0 0.0
  %1705 = vmatpush.msra.mxu0 0.0
  %1706 = vmatpush.msra.mxu0 0.0
  %1707 = vmatpush.msra.mxu0 0.0
  %1708 = vmatpush.msra.mxu0 0.0
  %1709 = vmatpush.msra.mxu0 %v1690
  %1710 = vmatpush.msra.mxu0 %v1689
  %1711 = vmatmul.f32.gmra.mxu0 %v1693
  %v1712 = vpop.f32.mrf.mxu0
  %v1713 = vadd.f32 0.0, %v1712
  %1714 = vdwg.mxu0
  %v1715 = vld [vmem:[%s4 + $0xe8] sm:$0xff]
  %v1716 = vld [vmem:[%s4 + $0xf0] sm:$0xff]
  %1718 = vset.pattern.permute.xlu0 0
  %1719 = vperm.xlu0 %1718, %v1715
  %v1720 = vpop.permute.xlu0 %1719
  %v1722 = vmul.f32 %v1713, %v1720
  %1724 = vset.pattern.permute.xlu0 0
  %1725 = vperm.xlu0 %1724, %v1716
  %v1726 = vpop.permute.xlu0 %1725
  %v1728 = vadd.f32 %v1722, %v1726
  %v1729 = vmax.f32 %v1728, 0.0
  %v1730 = vld [vmem:[%s4 + $0xf8] sm:$0xff]
  %1731 = vrot.lane.b32.xlu0 %v1729, 9
  %v1732 = vpop.permute.xlu0 %1731
  %1733 = vrot.lane.b32.xlu0 %v1729, 8
  %v1734 = vpop.permute.xlu0 %1733
  %1735 = vrot.lane.b32.xlu0 %v1729, 7
  %v1736 = vpop.permute.xlu0 %1735
  %1737 = vrot.lane.b32.xlu0 %v1729, 1
  %v1738 = vpop.permute.xlu0 %1737
  %1739 = vrot.lane.b32.xlu0 %v1729, 127
  %v1740 = vpop.permute.xlu0 %1739
  %1741 = vrot.lane.b32.xlu0 %v1729, 121
  %v1742 = vpop.permute.xlu0 %1741
  %1743 = vrot.lane.b32.xlu0 %v1729, 120
  %v1744 = vpop.permute.xlu0 %1743
  %1745 = vrot.lane.b32.xlu0 %v1729, 119
  %v1746 = vpop.permute.xlu0 %1745
  %v1747 = vmul.f32 %v1732, %v62
  %v1748 = vmul.f32 %v1734, %v63
  %v1749 = vmul.f32 %v1736, %v64
  %v1750 = vmul.f32 %v1738, %v65
  %v1751 = vmul.f32 %v1729, %v66
  %v1752 = vmul.f32 %v1740, %v67
  %v1753 = vmul.f32 %v1742, %v68
  %v1754 = vmul.f32 %v1744, %v69
  %v1755 = vmul.f32 %v1746, %v70
  %v1757 = vsel %vm215, %v1730, 0
  %1759 = vmatpush.msra.mxu0 0.0
  %1760 = vmatpush.msra.mxu0 0.0
  %1761 = vmatpush.msra.mxu0 0.0
  %1762 = vmatpush.msra.mxu0 0.0
  %1763 = vmatpush.msra.mxu0 0.0
  %1764 = vmatpush.msra.mxu0 0.0
  %1765 = vmatpush.msra.mxu0 0.0
  %1766 = vmatpush.msra.mxu0 %v1755
  %1767 = vmatpush.msra.mxu0 %v1754
  %1768 = vmatpush.msra.mxu0 %v1753
  %1769 = vmatpush.msra.mxu0 %v1752
  %1770 = vmatpush.msra.mxu0 %v1751
  %1771 = vmatpush.msra.mxu0 %v1750
  %1772 = vmatpush.msra.mxu0 %v1749
  %1773 = vmatpush.msra.mxu0 %v1748
  %1774 = vmatpush.msra.mxu0 %v1747
  %1775 = vmatmul.f32.gmra.mxu0 %v1757
  %v1776 = vpop.f32.mrf.mxu0
  %v1777 = vadd.f32 0.0, %v1776
  %1778 = vdwg.mxu0
  %v1779 = vld [vmem:[%s4 + $0x100] sm:$0xff]
  %v1780 = vld [vmem:[%s4 + $0x108] sm:$0xff]
  %v1781 = vld [vmem:[%s4 + $0x110] sm:$0xff]
  %v1782 = vld [vmem:[%s4 + $0x118] sm:$0xff]
  %v1783 = vld [vmem:[%s4 + $0x120] sm:$0xff]
  %v1784 = vld [vmem:[%s4 + $0x128] sm:$0xff]
  %1786 = vset.pattern.permute.xlu0 0
  %1787 = vperm.xlu0 %1786, %v1779
  %v1788 = vpop.permute.xlu0 %1787
  %1791 = vset.pattern.permute.xlu0 0
  %1792 = vperm.xlu0 %1791, %v1780
  %v1793 = vpop.permute.xlu0 %1792
  %1796 = vset.pattern.permute.xlu0 0
  %1797 = vperm.xlu0 %1796, %v1781
  %v1798 = vpop.permute.xlu0 %1797
  %v1800 = vmul.f32 %v1657, %v1788
  %v1801 = vmul.f32 %v1659, %v1793
  %v1802 = vmul.f32 %v1777, %v1798
  %1804 = vset.pattern.permute.xlu0 0
  %1805 = vperm.xlu0 %1804, %v1782
  %v1806 = vpop.permute.xlu0 %1805
  %1809 = vset.pattern.permute.xlu0 0
  %1810 = vperm.xlu0 %1809, %v1783
  %v1811 = vpop.permute.xlu0 %1810
  %1814 = vset.pattern.permute.xlu0 0
  %1815 = vperm.xlu0 %1814, %v1784
  %v1816 = vpop.permute.xlu0 %1815
  %v1818 = vadd.f32 %v1800, %v1806
  %v1819 = vadd.f32 %v1801, %v1811
  %v1820 = vadd.f32 %v1802, %v1816
  %v1821 = vmax.f32 %v1818, 0.0
  %v1822 = vmax.f32 %v1819, 0.0
  %v1823 = vmax.f32 %v1820, 0.0
  %v1824 = vld [vmem:[%s4 + $0x130] sm:$0xff]
  %v1826 = vsel %vm808, %v1824, 0
  %1828 = vmatpush.msra.mxu0 0.0
  %1829 = vmatpush.msra.mxu0 0.0
  %1830 = vmatpush.msra.mxu0 0.0
  %1831 = vmatpush.msra.mxu0 0.0
  %1832 = vmatpush.msra.mxu0 0.0
  %1833 = vmatpush.msra.mxu0 0.0
  %1834 = vmatpush.msra.mxu0 0.0
  %1835 = vmatpush.msra.mxu0 0.0
  %1836 = vmatpush.msra.mxu0 0.0
  %1837 = vmatpush.msra.mxu0 0.0
  %1838 = vmatpush.msra.mxu0 0.0
  %1839 = vmatpush.msra.mxu0 0.0
  %1840 = vmatpush.msra.mxu0 0.0
  %1841 = vmatpush.msra.mxu0 %v1823
  %1842 = vmatpush.msra.mxu0 %v1822
  %1843 = vmatpush.msra.mxu0 %v1821
  %1844 = vmatmul.f32.gmra.mxu0 %v1826
  %v1845 = vpop.f32.mrf.mxu0
  %v1846 = vadd.f32 0.0, %v1845
  %1847 = vdwg.mxu0
  %v1848 = vld [vmem:[%s4 + $0x138] sm:$0xff]
  %v1849 = vld [vmem:[%s4 + $0x140] sm:$0xff]
  %1851 = vset.pattern.permute.xlu0 0
  %1852 = vperm.xlu0 %1851, %v1848
  %v1853 = vpop.permute.xlu0 %1852
  %v1855 = vmul.f32 %v1846, %v1853
  %1857 = vset.pattern.permute.xlu0 0
  %1858 = vperm.xlu0 %1857, %v1849
  %v1859 = vpop.permute.xlu0 %1858
  %v1861 = vadd.f32 %v1855, %v1859
  %v1862 = vmax.f32 %v1861, 0.0
  %v1863 = vld [vmem:[%s4 + $0x148] sm:$0xff]
  %1864 = vrot.lane.b32.xlu0 %v1862, 9
  %v1865 = vpop.permute.xlu0 %1864
  %1866 = vrot.lane.b32.xlu0 %v1862, 8
  %v1867 = vpop.permute.xlu0 %1866
  %1868 = vrot.lane.b32.xlu0 %v1862, 7
  %v1869 = vpop.permute.xlu0 %1868
  %1870 = vrot.lane.b32.xlu0 %v1862, 1
  %v1871 = vpop.permute.xlu0 %1870
  %1872 = vrot.lane.b32.xlu0 %v1862, 127
  %v1873 = vpop.permute.xlu0 %1872
  %1874 = vrot.lane.b32.xlu0 %v1862, 121
  %v1875 = vpop.permute.xlu0 %1874
  %1876 = vrot.lane.b32.xlu0 %v1862, 120
  %v1877 = vpop.permute.xlu0 %1876
  %1878 = vrot.lane.b32.xlu0 %v1862, 119
  %v1879 = vpop.permute.xlu0 %1878
  %v1880 = vmul.f32 %v1865, %v62
  %v1881 = vmul.f32 %v1867, %v63
  %v1882 = vmul.f32 %v1869, %v64
  %v1883 = vmul.f32 %v1871, %v65
  %v1884 = vmul.f32 %v1862, %v66
  %v1885 = vmul.f32 %v1873, %v67
  %v1886 = vmul.f32 %v1875, %v68
  %v1887 = vmul.f32 %v1877, %v69
  %v1888 = vmul.f32 %v1879, %v70
  %v1890 = vsel %vm215, %v1863, 0
  %1892 = vmatpush.msra.mxu0 0.0
  %1893 = vmatpush.msra.mxu0 0.0
  %1894 = vmatpush.msra.mxu0 0.0
  %1895 = vmatpush.msra.mxu0 0.0
  %1896 = vmatpush.msra.mxu0 0.0
  %1897 = vmatpush.msra.mxu0 0.0
  %1898 = vmatpush.msra.mxu0 0.0
  %1899 = vmatpush.msra.mxu0 %v1888
  %1900 = vmatpush.msra.mxu0 %v1887
  %1901 = vmatpush.msra.mxu0 %v1886
  %1902 = vmatpush.msra.mxu0 %v1885
  %1903 = vmatpush.msra.mxu0 %v1884
  %1904 = vmatpush.msra.mxu0 %v1883
  %1905 = vmatpush.msra.mxu0 %v1882
  %1906 = vmatpush.msra.mxu0 %v1881
  %1907 = vmatpush.msra.mxu0 %v1880
  %1908 = vmatmul.f32.gmra.mxu0 %v1890
  %v1909 = vpop.f32.mrf.mxu0
  %v1910 = vadd.f32 0.0, %v1909
  %1911 = vdwg.mxu0
  %v1912 = vld [vmem:[%s4 + $0x1a0] sm:$0xff]
  %v1913 = vld [vmem:[%s4 + $0x1a8] sm:$0xff]
  %v1914 = vld [vmem:[%s4 + $0x1b0] sm:$0xff]
  %v1915 = vld [vmem:[%s4 + $0x1b8] sm:$0xff]
  %v1916 = vld [vmem:[%s4 + $0x1c0] sm:$0xff]
  %v1917 = vld [vmem:[%s4 + $0x1c8] sm:$0xff]
  %v1918 = vld [vmem:[%s4 + $0x1d0] sm:$0xff]
  %v1919 = vld [vmem:[%s4 + $0x1d8] sm:$0xff]
  %1921 = vset.pattern.permute.xlu0 0
  %1922 = vperm.xlu0 %1921, %v1912
  %v1923 = vpop.permute.xlu0 %1922
  %1926 = vset.pattern.permute.xlu0 0
  %1927 = vperm.xlu0 %1926, %v1913
  %v1928 = vpop.permute.xlu0 %1927
  %1931 = vset.pattern.permute.xlu0 0
  %1932 = vperm.xlu0 %1931, %v1914
  %v1933 = vpop.permute.xlu0 %1932
  %1936 = vset.pattern.permute.xlu0 0
  %1937 = vperm.xlu0 %1936, %v1915
  %v1938 = vpop.permute.xlu0 %1937
  %v1940 = vmul.f32 %v1657, %v1923
  %v1941 = vmul.f32 %v1659, %v1928
  %v1942 = vmul.f32 %v1777, %v1933
  %v1943 = vmul.f32 %v1910, %v1938
  %1945 = vset.pattern.permute.xlu0 0
  %1946 = vperm.xlu0 %1945, %v1916
  %v1947 = vpop.permute.xlu0 %1946
  %1950 = vset.pattern.permute.xlu0 0
  %1951 = vperm.xlu0 %1950, %v1917
  %v1952 = vpop.permute.xlu0 %1951
  %1955 = vset.pattern.permute.xlu0 0
  %1956 = vperm.xlu0 %1955, %v1918
  %v1957 = vpop.permute.xlu0 %1956
  %1960 = vset.pattern.permute.xlu0 0
  %1961 = vperm.xlu0 %1960, %v1919
  %v1962 = vpop.permute.xlu0 %1961
  %v1964 = vadd.f32 %v1940, %v1947
  %v1965 = vadd.f32 %v1941, %v1952
  %v1966 = vadd.f32 %v1942, %v1957
  %v1967 = vadd.f32 %v1943, %v1962
  %v1968 = vmax.f32 %v1964, 0.0
  %v1969 = vmax.f32 %v1965, 0.0
  %v1970 = vmax.f32 %v1966, 0.0
  %v1971 = vmax.f32 %v1967, 0.0
  %v1972 = vld [vmem:[%s4 + $0x200] sm:$0xff]
  %v1973 = vld [vmem:[%s4 + $0x208] sm:$0xff]
  %v1974 = vld [vmem:[%s4 + $0x210] sm:$0xff]
  %v1975 = vld [vmem:[%s4 + $0x218] sm:$0xff]
  %v1976 = vld [vmem:[%s4 + $0x220] sm:$0xff]
  %v1977 = vld [vmem:[%s4 + $0x228] sm:$0xff]
  %v1978 = vld [vmem:[%s4 + $0x230] sm:$0xff]
  %v1979 = vld [vmem:[%s4 + $0x238] sm:$0xff]
  %v1980 = vld [vmem:[%s4 + $0x240] sm:$0xff]
  %v1981 = vld [vmem:[%s4 + $0x248] sm:$0xff]
  %v1982 = vld [vmem:[%s4 + $0x250] sm:$0xff]
  %v1983 = vld [vmem:[%s4 + $0x258] sm:$0xff]
  %v1984 = vld [vmem:[%s4 + $0x260] sm:$0xff]
  %v1985 = vld [vmem:[%s4 + $0x268] sm:$0xff]
  %v1986 = vld [vmem:[%s4 + $0x270] sm:$0xff]
  %v1987 = vld [vmem:[%s4 + $0x278] sm:$0xff]
  %1988 = vmatpush.msra.mxu0 %v1987
  %1989 = vmatpush.msra.mxu0 %v1986
  %1990 = vmatpush.msra.mxu0 %v1985
  %1991 = vmatpush.msra.mxu0 %v1984
  %1992 = vmatpush.msra.mxu0 %v1983
  %1993 = vmatpush.msra.mxu0 %v1982
  %1994 = vmatpush.msra.mxu0 %v1981
  %1995 = vmatpush.msra.mxu0 %v1980
  %1996 = vmatpush.msra.mxu0 %v1979
  %1997 = vmatpush.msra.mxu0 %v1978
  %1998 = vmatpush.msra.mxu0 %v1977
  %1999 = vmatpush.msra.mxu0 %v1976
  %2000 = vmatpush.msra.mxu0 %v1975
  %2001 = vmatpush.msra.mxu0 %v1974
  %2002 = vmatpush.msra.mxu0 %v1973
  %2003 = vmatpush.msra.mxu0 %v1972
  %2004 = vmatmul.f32.gmra.mxu0 %v1968
  %v2005 = vpop.f32.mrf.mxu0
  %v2006 = vadd.f32 0.0, %v2005
  %2007 = vmatmul.f32.gmra.mxu0 %v1969
  %v2008 = vpop.f32.mrf.mxu0
  %v2009 = vadd.f32 0.0, %v2008
  %2010 = vmatmul.f32.gmra.mxu0 %v1970
  %v2011 = vpop.f32.mrf.mxu0
  %v2012 = vadd.f32 0.0, %v2011
  %2013 = vmatmul.f32.gmra.mxu0 %v1971
  %v2014 = vpop.f32.mrf.mxu0
  %v2015 = vadd.f32 0.0, %v2014
  %2016 = vdwg.mxu0
  %v2017 = vld [vmem:[%s4 + $0x1e0] sm:$0xff]
  %v2018 = vld [vmem:[%s4 + $0x1e8] sm:$0x3f]
  %v2019 = vld [vmem:[%s4 + $0x1f0] sm:$0xff]
  %v2020 = vld [vmem:[%s4 + $0x1f8] sm:$0x3f]
  %2022 = vset.pattern.permute.xlu0 0
  %2023 = vperm.xlu0 %2022, %v2019
  %v2024 = vpop.permute.xlu0 %2023
  %2027 = vset.pattern.permute.xlu0 0
  %2028 = vperm.xlu0 %2027, %v2020
  %v2029 = vpop.permute.xlu0 %2028
  %v2032 = vsel %vm1246, %v2017, 0
  %v2035 = vsel %vm1246, %v2018, 0
  %2037 = vmatpush.msra.mxu0 0.0
  %2038 = vmatpush.msra.mxu0 0.0
  %2039 = vmatpush.msra.mxu0 0.0
  %2040 = vmatpush.msra.mxu0 0.0
  %2041 = vmatpush.msra.mxu0 0.0
  %2042 = vmatpush.msra.mxu0 0.0
  %2043 = vmatpush.msra.mxu0 0.0
  %2044 = vmatpush.msra.mxu0 0.0
  %2045 = vmatpush.msra.mxu0 0.0
  %2046 = vmatpush.msra.mxu0 0.0
  %2047 = vmatpush.msra.mxu0 0.0
  %2048 = vmatpush.msra.mxu0 0.0
  %2049 = vmatpush.msra.mxu0 %v2015
  %2050 = vmatpush.msra.mxu0 %v2012
  %2051 = vmatpush.msra.mxu0 %v2009
  %2052 = vmatpush.msra.mxu0 %v2006
  %2053 = vmatmul.f32.gmra.mxu0 %v2032
  %v2054 = vpop.f32.mrf.mxu0
  %v2055 = vadd.f32 %v2024, %v2054
  %2056 = vmatmul.f32.gmra.mxu0 %v2035
  %v2057 = vpop.f32.mrf.mxu0
  %v2058 = vadd.f32 %v2029, %v2057
  %2059 = vdwg.mxu0
  %vm2060 = vcmask 15360
  %2061 = vst.msk [vmem:[%s6] sm:$0xff] %vm2060, %v2055
  %vm2062 = vcmask 13312
  %2063 = vst.msk [vmem:[%s6 + $0x8] sm:$0x3f] %vm2062, %v2058
  // Predicated region
  $region22: #{dense_block3_forward.1} parent=0 // pred_check
    _
  $region23: #{dense_block3_forward.1} parent=0 // pred_check_branch
    %2065 = sbr.rel (0) target = $region25
  $region24: #{dense_block3_forward.1} parent=0 // pred_region
    _
  $region25: #{dense_block3_forward.1} parent=0 // pred_fallthru
    _
  // Predicated region
  $region26: #{dense_block3_forward.1} parent=0 // pred_check
    _
  $region27: #{dense_block3_forward.1} parent=0 // pred_check_branch
    %2067 = sbr.rel (0) target = $region29
  $region28: #{dense_block3_forward.1} parent=0 // pred_region
    _
  $region29: #{dense_block3_forward.1} parent=0 // pred_fallthru
    _
  // Predicated region
  $region30: #{dense_block3_forward.1} parent=0 // pred_check
    _
  $region31: #{dense_block3_forward.1} parent=0 // pred_check_branch
    %2069 = sbr.rel (0) target = $region33
  $region32: #{dense_block3_forward.1} parent=0 // pred_region
    _
  $region33: #{dense_block3_forward.1} parent=0 // pred_fallthru
    _
  // Predicated region
  $region34: #{dense_block3_forward.1} parent=0 // pred_check
    _
  $region35: #{dense_block3_forward.1} parent=0 // pred_check_branch
    %2071 = sbr.rel (0) target = $region37
  $region36: #{dense_block3_forward.1} parent=0 // pred_region
    _
  $region37: #{dense_block3_forward.1} parent=0 // pred_fallthru
    _

</llo_original>
